<compile_context>
chip_gen: v6e
topology: v6e:2x2x1
jax: 0.10.0
libtpu: 0.0.40
codegen_flags: <defaults>
</compile_context>

<pallas_src>
import math

import jax
import jax.numpy as jnp
from jax import lax
from jax.experimental import pallas as pl
from jax.experimental.pallas import tpu as pltpu

NEG_INF = -1e9
_PAD_OFF = 8  # aligned sublane offset where the conv input is stored in scratch


# ----------------------------------------------------------------------------
# Fused kernel (one batch element per grid step)
# ----------------------------------------------------------------------------
def _make_fused_kernel(num_enc, num_dec, n_nodes):
    def _softmax_rows(e):
        e = e - jnp.max(e, axis=-1, keepdims=True)
        p = jnp.exp(e)
        # approx=True -> EUP vrcp slot (otherwise idle next to the exp)
        return p * pl.reciprocal(jnp.sum(p, axis=-1, keepdims=True), approx=True)

    def _gat(h_in, bias, w_ref, asrc_ref, adst_ref):
        # h = x @ W  (bf16 operands, f32 accumulate on the MXU)
        h = jnp.dot(h_in.astype(jnp.bfloat16), w_ref[...],
                    preferred_element_type=jnp.float32)                 # [N, F]
        # e[i, j] = a_src . h_i + a_dst . h_j
        e_src = jnp.sum(h * asrc_ref[...], axis=-1, keepdims=True)      # [N,1] VPU
        # dst scores must live on the lane axis -> one tiny MXU matvec
        e_dst = lax.dot_general(adst_ref[...], h, (((1,), (1,)), ((), ())),
                                preferred_element_type=jnp.float32)     # [1, N]
        e = e_src + e_dst                                               # [N, N]
        e = jnp.where(e > 0, e, 0.2 * e)          # LeakyReLU(0.2)
        e = e + bias                              # adjacency mask (additive bias)
        alpha = _softmax_rows(e)
        o = jnp.dot(alpha.astype(jnp.bfloat16), h.astype(jnp.bfloat16),
                    preferred_element_type=jnp.float32)                 # [N, F]
        return jnp.where(o > 0, o, jnp.exp(o) - 1.0)                    # ELU

    def kernel(*refs):
        it = iter(refs)
        x_ref = next(it)                    # [1, N, Fin]
        bias_ref = next(it)                 # [N, N]
        enc = [(next(it), next(it), next(it)) for _ in range(num_enc)]
        wqkv_ref = next(it)                 # [3, D, Dh]
        dec = [(next(it), next(it), next(it)) for _ in range(num_dec)]
        cw0_ref, cw1_ref, cw2_ref, cb_ref = next(it), next(it), next(it), next(it)
        out_ref = next(it)                  # [1, N, Cout]
        pad_ref = next(it)                  # VMEM scratch [N+16, F]

        x = x_ref[0]                        # [N, Fin]
        bias = bias_ref[...]                # loaded once, reused by every GAT

        # ---- encoder GAT stack (dropout p=0 -> identity) ----
        enc_outs = []
        for (w, a_s, a_d) in enc:
            if not enc_outs:
                h_in = x
            elif len(enc_outs) == 1:
                h_in = enc_outs[0]
            else:  # only reachable for >2 layers
                h_in = jnp.concatenate(enc_outs, axis=-1)
            enc_outs.append(_gat(h_in, bias, w, a_s, a_d))

        # ---- spatio-temporal self-attention (stacked QKV weight) ----
        dh = wqkv_ref.shape[2]
        scale = 1.0 / math.sqrt(dh)
        st_in = enc_outs[-1].astype(jnp.bfloat16)
        q = jnp.dot(st_in, wqkv_ref[0], preferred_element_type=jnp.float32)
        k = jnp.dot(st_in, wqkv_ref[1], preferred_element_type=jnp.float32)
        v = jnp.dot(st_in, wqkv_ref[2], preferred_element_type=jnp.float32)
        s = lax.dot_general(q.astype(jnp.bfloat16), k.astype(jnp.bfloat16),
                            (((1,), (1,)), ((), ())),
                            preferred_element_type=jnp.float32) * scale
        attn = _softmax_rows(s)
        st_out = jnp.dot(attn.astype(jnp.bfloat16), v.astype(jnp.bfloat16),
                         preferred_element_type=jnp.float32)            # [N, Dh]

        # ---- decoder GAT stack ----
        dec_outs = []
        for (w, a_s, a_d) in dec:
            if not dec_outs:
                h_in = st_out
            elif len(dec_outs) == 1:
                h_in = dec_outs[0]
            else:
                h_in = jnp.concatenate(dec_outs, axis=-1)
            dec_outs.append(_gat(h_in, bias, w, a_s, a_d))

        # ---- temporal Conv1d(Cin, Cout, kernel=3, padding=1) ----
        # zero-padded VMEM scratch + shifted slices: O(N*C) instead of the
        # old O(N^2*C) selection-matrix matmuls.
        h = dec_outs[-1]                                                # [N, C]
        pad_ref[...] = jnp.zeros_like(pad_ref)
        pad_ref[pl.ds(_PAD_OFF, n_nodes), :] = h.astype(pad_ref.dtype)  # aligned store
        x_prev = pad_ref[pl.ds(_PAD_OFF - 1, n_nodes), :]               # x[t-1], 0-padded
        x_next = pad_ref[pl.ds(_PAD_OFF + 1, n_nodes), :]               # x[t+1], 0-padded
        y = (jnp.dot(x_prev.astype(jnp.bfloat16), cw0_ref[...],
                     preferred_element_type=jnp.float32)
             + jnp.dot(h.astype(jnp.bfloat16), cw1_ref[...],
                       preferred_element_type=jnp.float32)
             + jnp.dot(x_next.astype(jnp.bfloat16), cw2_ref[...],
                       preferred_element_type=jnp.float32)
             + cb_ref[...])
        out_ref[0] = y.astype(out_ref.dtype)

    return kernel


# ----------------------------------------------------------------------------
# Wrapper: one pallas_call for the whole forward
# ----------------------------------------------------------------------------
def stf_informer_forward(params, x, adj):
    B, N, Fin = x.shape
    # Precompute the adjacency bias once (outside the kernel, outside the loop).
    bias = jnp.where(adj > 0, 0.0, NEG_INF).astype(jnp.float32)

    enc, dec = params["enc"], params["dec"]
    wqkv = params["st"]["Wqkv"]
    tc = params["tconv"]
    gat_out_dim = dec[-1]["W"].shape[1]
    output_dim = tc["W1"].shape[1]

    def _full(a):
        return pl.BlockSpec(a.shape, lambda b, _n=a.ndim: (0,) * _n)

    inputs = [x, bias]
    in_specs = [pl.BlockSpec((1, N, Fin), lambda b: (b, 0, 0)), _full(bias)]
    for p in enc:
        for name in ("W", "a_src", "a_dst"):
            inputs.append(p[name])
            in_specs.append(_full(p[name]))
    inputs.append(wqkv)
    in_specs.append(_full(wqkv))
    for p in dec:
        for name in ("W", "a_src", "a_dst"):
            inputs.append(p[name])
            in_specs.append(_full(p[name]))
    for name in ("W0", "W1", "W2", "b"):
        inputs.append(tc[name])
        in_specs.append(_full(tc[name]))

    kernel = _make_fused_kernel(len(enc), len(dec), N)

    return pl.pallas_call(
        kernel,
        out_shape=jax.ShapeDtypeStruct((B, N, output_dim), jnp.float32),
        grid=(B,),
        in_specs=in_specs,
        out_specs=pl.BlockSpec((1, N, output_dim), lambda b: (b, 0, 0)),
        scratch_shapes=[pltpu.VMEM((N + 16, gat_out_dim), jnp.float32)],
        compiler_params=pltpu.CompilerParams(
            dimension_semantics=("parallel",)),  # shards batch over v7x's 2 TCs
    )(*inputs)


# ----------------------------------------------------------------------------
# Parameter init (matmul weights stored in bf16; vectors / biases in f32)
# ----------------------------------------------------------------------------
def init_params(key, input_dim, output_dim, hidden_dim, num_heads,
                num_encoder_layers, num_decoder_layers):
    out_dim = hidden_dim * num_heads

    def glorot(k, shape, dtype=jnp.float32):
        fan_in, fan_out = shape[-2], shape[-1]
        s = math.sqrt(2.0 / (fan_in + fan_out))
        return (s * jax.random.normal(k, shape, jnp.float32)).astype(dtype)

    params = {"enc": [], "dec": []}
    for i in range(num_encoder_layers):
        in_dim = input_dim if i == 0 else out_dim
        key, k1, k2, k3 = jax.random.split(key, 4)
        params["enc"].append({
            "W": glorot(k1, (in_dim, out_dim), jnp.bfloat16),
            "a_src": glorot(k2, (1, out_dim)),
            "a_dst": glorot(k3, (1, out_dim)),
        })

    key, kq, kk, kv = jax.random.split(key, 4)
    wq = glorot(kq, (out_dim, hidden_dim))
    wk = glorot(kk, (out_dim, hidden_dim))
    wv = glorot(kv, (out_dim, hidden_dim))
    params["st"] = {"Wqkv": jnp.stack([wq, wk, wv], axis=0).astype(jnp.bfloat16)}

    for i in range(num_decoder_layers):
        in_dim = hidden_dim if i == 0 else out_dim
        key, k1, k2, k3 = jax.random.split(key, 4)
        params["dec"].append({
            "W": glorot(k1, (in_dim, out_dim), jnp.bfloat16),
            "a_src": glorot(k2, (1, out_dim)),
            "a_dst": glorot(k3, (1, out_dim)),
        })

    key, k0, k1, k2, kb = jax.random.split(key, 5)
    params["tconv"] = {
        "W0": glorot(k0, (out_dim, output_dim), jnp.bfloat16),
        "W1": glorot(k1, (out_dim, output_dim), jnp.bfloat16),
        "W2": glorot(k2, (out_dim, output_dim), jnp.bfloat16),
        "b": 0.01 * jax.random.normal(kb, (1, output_dim), jnp.float32),
    }
    return params


# ----------------------------------------------------------------------------
if __name__ == "__main__":
    B, N = 2, 16
    input_dim, output_dim = 8, 4
    hidden_dim, num_heads = 8, 4
    num_encoder_layers, num_decoder_layers = 2, 2

    key = jax.random.PRNGKey(0)
    key, kx, ka, kp = jax.random.split(key, 4)

    x = jax.random.normal(kx, (B, N, input_dim), jnp.float32)
    # symmetric binary adjacency with self-loops
    a = (jax.random.uniform(ka, (N, N)) > 0.6).astype(jnp.float32)
    adj = jnp.clip(a + a.T + jnp.eye(N, dtype=jnp.float32), 0.0, 1.0)

    params = init_params(kp, input_dim, output_dim, hidden_dim, num_heads,
                         num_encoder_layers, num_decoder_layers)

    fwd = jax.jit(stf_informer_forward)
    out = fwd(params, x, adj)
    jax.block_until_ready(out)

    assert out.shape == (B, N, output_dim), out.shape
    assert bool(jnp.all(jnp.isfinite(out)))
    print("KERNEL_OK")
</pallas_src>

<mosaic_0001>
module attributes {stable_mosaic.version = 11 : i64} {
  func.func @kernel(%arg0: i32, %arg1: memref<1x16x8xf32, #tpu.memory_space<vmem>>, %arg2: memref<16x16xf32, #tpu.memory_space<vmem>>, %arg3: memref<8x32xbf16, #tpu.memory_space<vmem>>, %arg4: memref<1x32xf32, #tpu.memory_space<vmem>>, %arg5: memref<1x32xf32, #tpu.memory_space<vmem>>, %arg6: memref<32x32xbf16, #tpu.memory_space<vmem>>, %arg7: memref<1x32xf32, #tpu.memory_space<vmem>>, %arg8: memref<1x32xf32, #tpu.memory_space<vmem>>, %arg9: memref<3x32x8xbf16, #tpu.memory_space<vmem>>, %arg10: memref<8x32xbf16, #tpu.memory_space<vmem>>, %arg11: memref<1x32xf32, #tpu.memory_space<vmem>>, %arg12: memref<1x32xf32, #tpu.memory_space<vmem>>, %arg13: memref<32x32xbf16, #tpu.memory_space<vmem>>, %arg14: memref<1x32xf32, #tpu.memory_space<vmem>>, %arg15: memref<1x32xf32, #tpu.memory_space<vmem>>, %arg16: memref<32x4xbf16, #tpu.memory_space<vmem>>, %arg17: memref<32x4xbf16, #tpu.memory_space<vmem>>, %arg18: memref<32x4xbf16, #tpu.memory_space<vmem>>, %arg19: memref<1x4xf32, #tpu.memory_space<vmem>>, %arg20: memref<1x16x4xf32, #tpu.memory_space<vmem>>, %arg21: memref<32x32xf32, #tpu.memory_space<vmem>>) attributes {dimension_semantics = [#tpu.dimension_semantics<parallel>], iteration_bounds = array<i64: 2>, scalar_prefetch = 0 : i64, scratch_operands = 1 : i64, tpu.core_type = #tpu.core_type<tc>, window_params = [{transform_indices = @transform_0, window_bounds = array<i64: 1, 16, 8>}, {pipeline_mode = #tpu.pipeline_mode<synchronous>, transform_indices = @transform_1, window_bounds = array<i64: 16, 16>}, {pipeline_mode = #tpu.pipeline_mode<synchronous>, transform_indices = @transform_2, window_bounds = array<i64: 8, 32>}, {pipeline_mode = #tpu.pipeline_mode<synchronous>, transform_indices = @transform_3, window_bounds = array<i64: 1, 32>}, {pipeline_mode = #tpu.pipeline_mode<synchronous>, transform_indices = @transform_4, window_bounds = array<i64: 1, 32>}, {pipeline_mode = #tpu.pipeline_mode<synchronous>, transform_indices = @transform_5, window_bounds = array<i64: 32, 32>}, {pipeline_mode = #tpu.pipeline_mode<synchronous>, transform_indices = @transform_6, window_bounds = array<i64: 1, 32>}, {pipeline_mode = #tpu.pipeline_mode<synchronous>, transform_indices = @transform_7, window_bounds = array<i64: 1, 32>}, {pipeline_mode = #tpu.pipeline_mode<synchronous>, transform_indices = @transform_8, window_bounds = array<i64: 3, 32, 8>}, {pipeline_mode = #tpu.pipeline_mode<synchronous>, transform_indices = @transform_9, window_bounds = array<i64: 8, 32>}, {pipeline_mode = #tpu.pipeline_mode<synchronous>, transform_indices = @transform_10, window_bounds = array<i64: 1, 32>}, {pipeline_mode = #tpu.pipeline_mode<synchronous>, transform_indices = @transform_11, window_bounds = array<i64: 1, 32>}, {pipeline_mode = #tpu.pipeline_mode<synchronous>, transform_indices = @transform_12, window_bounds = array<i64: 32, 32>}, {pipeline_mode = #tpu.pipeline_mode<synchronous>, transform_indices = @transform_13, window_bounds = array<i64: 1, 32>}, {pipeline_mode = #tpu.pipeline_mode<synchronous>, transform_indices = @transform_14, window_bounds = array<i64: 1, 32>}, {pipeline_mode = #tpu.pipeline_mode<synchronous>, transform_indices = @transform_15, window_bounds = array<i64: 32, 4>}, {pipeline_mode = #tpu.pipeline_mode<synchronous>, transform_indices = @transform_16, window_bounds = array<i64: 32, 4>}, {pipeline_mode = #tpu.pipeline_mode<synchronous>, transform_indices = @transform_17, window_bounds = array<i64: 32, 4>}, {pipeline_mode = #tpu.pipeline_mode<synchronous>, transform_indices = @transform_18, window_bounds = array<i64: 1, 4>}, {transform_indices = @transform_19, window_bounds = array<i64: 1, 16, 4>}]} {
    %c0 = arith.constant 0 : index
    %c0_0 = arith.constant 0 : index
    %c0_1 = arith.constant 0 : index
    %0 = vector.load %arg1[%c0, %c0_0, %c0_1] : memref<1x16x8xf32, #tpu.memory_space<vmem>>, vector<1x16x8xf32>
    %1 = vector.shape_cast %0 : vector<1x16x8xf32> to vector<16x8xf32>
    %c0_2 = arith.constant 0 : index
    %c0_3 = arith.constant 0 : index
    %2 = vector.load %arg2[%c0_2, %c0_3] : memref<16x16xf32, #tpu.memory_space<vmem>>, vector<16x16xf32>
    %3 = arith.truncf %1 : vector<16x8xf32> to vector<16x8xbf16>
    %c0_4 = arith.constant 0 : index
    %c0_5 = arith.constant 0 : index
    %4 = vector.load %arg3[%c0_4, %c0_5] : memref<8x32xbf16, #tpu.memory_space<vmem>>, vector<8x32xbf16>
    %cst = arith.constant dense<0.000000e+00> : vector<16x32xf32>
    %5 = tpu.matmul %3, %4, %cst {dimension_numbers = #tpu.dot_dimension_numbers<[1], [0], [0], [1], [0, 0, 1, 1], [], []>} : vector<16x8xbf16>, vector<8x32xbf16>, vector<16x32xf32> -> vector<16x32xf32>
    %c0_6 = arith.constant 0 : index
    %c0_7 = arith.constant 0 : index
    %6 = vector.load %arg4[%c0_6, %c0_7] : memref<1x32xf32, #tpu.memory_space<vmem>>, vector<1x32xf32>
    %7 = vector.broadcast %6 : vector<1x32xf32> to vector<16x32xf32>
    %8 = arith.mulf %5, %7 : vector<16x32xf32>
    %cst_8 = arith.constant dense<0.000000e+00> : vector<16xf32>
    %9 = vector.multi_reduction <add>, %8, %cst_8 [1] : vector<16x32xf32> to vector<16xf32>
    %10 = vector.shape_cast %9 : vector<16xf32> to vector<16x1xf32>
    %c0_9 = arith.constant 0 : index
    %c0_10 = arith.constant 0 : index
    %11 = vector.load %arg5[%c0_9, %c0_10] : memref<1x32xf32, #tpu.memory_space<vmem>>, vector<1x32xf32>
    %cst_11 = arith.constant dense<0.000000e+00> : vector<1x16xf32>
    %12 = tpu.matmul %11, %5, %cst_11 {dimension_numbers = #tpu.dot_dimension_numbers<[1], [1], [0], [0], [0, 0, 1, 0], [], []>} : vector<1x32xf32>, vector<16x32xf32>, vector<1x16xf32> -> vector<1x16xf32>
    %13 = vector.broadcast %10 : vector<16x1xf32> to vector<16x16xf32>
    %14 = vector.broadcast %12 : vector<1x16xf32> to vector<16x16xf32>
    %15 = arith.addf %13, %14 : vector<16x16xf32>
    %cst_12 = arith.constant 0.000000e+00 : f32
    %16 = vector.broadcast %cst_12 : f32 to vector<16x16xf32>
    %17 = arith.cmpf ogt, %15, %16 : vector<16x16xf32>
    %cst_13 = arith.constant 2.000000e-01 : f32
    %18 = vector.broadcast %cst_13 : f32 to vector<16x16xf32>
    %19 = arith.mulf %18, %15 : vector<16x16xf32>
    %20 = arith.select %17, %15, %19 : vector<16x16xi1>, vector<16x16xf32>
    %21 = arith.addf %20, %2 : vector<16x16xf32>
    %cst_14 = arith.constant dense<0xFF800000> : vector<16xf32>
    %22 = vector.multi_reduction <maximumf>, %21, %cst_14 [1] : vector<16x16xf32> to vector<16xf32>
    %23 = vector.shape_cast %22 : vector<16xf32> to vector<16x1xf32>
    %24 = vector.broadcast %23 : vector<16x1xf32> to vector<16x16xf32>
    %25 = arith.subf %21, %24 : vector<16x16xf32>
    %26 = math.exp %25 : vector<16x16xf32>
    %cst_15 = arith.constant dense<0.000000e+00> : vector<16xf32>
    %27 = vector.multi_reduction <add>, %26, %cst_15 [1] : vector<16x16xf32> to vector<16xf32>
    %28 = vector.shape_cast %27 : vector<16xf32> to vector<16x1xf32>
    %29 = tpu.reciprocal %28 {approx = true} : vector<16x1xf32> -> vector<16x1xf32>
    %30 = vector.broadcast %29 : vector<16x1xf32> to vector<16x16xf32>
    %31 = arith.mulf %26, %30 : vector<16x16xf32>
    %32 = arith.truncf %31 : vector<16x16xf32> to vector<16x16xbf16>
    %33 = arith.truncf %5 : vector<16x32xf32> to vector<16x32xbf16>
    %cst_16 = arith.constant dense<0.000000e+00> : vector<16x32xf32>
    %34 = tpu.matmul %32, %33, %cst_16 {dimension_numbers = #tpu.dot_dimension_numbers<[1], [0], [0], [1], [0, 0, 1, 1], [], []>} : vector<16x16xbf16>, vector<16x32xbf16>, vector<16x32xf32> -> vector<16x32xf32>
    %cst_17 = arith.constant 0.000000e+00 : f32
    %35 = vector.broadcast %cst_17 : f32 to vector<16x32xf32>
    %36 = arith.cmpf ogt, %34, %35 : vector<16x32xf32>
    %37 = math.exp %34 : vector<16x32xf32>
    %cst_18 = arith.constant 1.000000e+00 : f32
    %38 = vector.broadcast %cst_18 : f32 to vector<16x32xf32>
    %39 = arith.subf %37, %38 : vector<16x32xf32>
    %40 = arith.select %36, %34, %39 : vector<16x32xi1>, vector<16x32xf32>
    %41 = arith.truncf %40 : vector<16x32xf32> to vector<16x32xbf16>
    %c0_19 = arith.constant 0 : index
    %c0_20 = arith.constant 0 : index
    %42 = vector.load %arg6[%c0_19, %c0_20] : memref<32x32xbf16, #tpu.memory_space<vmem>>, vector<32x32xbf16>
    %cst_21 = arith.constant dense<0.000000e+00> : vector<16x32xf32>
    %43 = tpu.matmul %41, %42, %cst_21 {dimension_numbers = #tpu.dot_dimension_numbers<[1], [0], [0], [1], [0, 0, 1, 1], [], []>} : vector<16x32xbf16>, vector<32x32xbf16>, vector<16x32xf32> -> vector<16x32xf32>
    %c0_22 = arith.constant 0 : index
    %c0_23 = arith.constant 0 : index
    %44 = vector.load %arg7[%c0_22, %c0_23] : memref<1x32xf32, #tpu.memory_space<vmem>>, vector<1x32xf32>
    %45 = vector.broadcast %44 : vector<1x32xf32> to vector<16x32xf32>
    %46 = arith.mulf %43, %45 : vector<16x32xf32>
    %cst_24 = arith.constant dense<0.000000e+00> : vector<16xf32>
    %47 = vector.multi_reduction <add>, %46, %cst_24 [1] : vector<16x32xf32> to vector<16xf32>
    %48 = vector.shape_cast %47 : vector<16xf32> to vector<16x1xf32>
    %c0_25 = arith.constant 0 : index
    %c0_26 = arith.constant 0 : index
    %49 = vector.load %arg8[%c0_25, %c0_26] : memref<1x32xf32, #tpu.memory_space<vmem>>, vector<1x32xf32>
    %cst_27 = arith.constant dense<0.000000e+00> : vector<1x16xf32>
    %50 = tpu.matmul %49, %43, %cst_27 {dimension_numbers = #tpu.dot_dimension_numbers<[1], [1], [0], [0], [0, 0, 1, 0], [], []>} : vector<1x32xf32>, vector<16x32xf32>, vector<1x16xf32> -> vector<1x16xf32>
    %51 = vector.broadcast %48 : vector<16x1xf32> to vector<16x16xf32>
    %52 = vector.broadcast %50 : vector<1x16xf32> to vector<16x16xf32>
    %53 = arith.addf %51, %52 : vector<16x16xf32>
    %cst_28 = arith.constant 0.000000e+00 : f32
    %54 = vector.broadcast %cst_28 : f32 to vector<16x16xf32>
    %55 = arith.cmpf ogt, %53, %54 : vector<16x16xf32>
    %cst_29 = arith.constant 2.000000e-01 : f32
    %56 = vector.broadcast %cst_29 : f32 to vector<16x16xf32>
    %57 = arith.mulf %56, %53 : vector<16x16xf32>
    %58 = arith.select %55, %53, %57 : vector<16x16xi1>, vector<16x16xf32>
    %59 = arith.addf %58, %2 : vector<16x16xf32>
    %cst_30 = arith.constant dense<0xFF800000> : vector<16xf32>
    %60 = vector.multi_reduction <maximumf>, %59, %cst_30 [1] : vector<16x16xf32> to vector<16xf32>
    %61 = vector.shape_cast %60 : vector<16xf32> to vector<16x1xf32>
    %62 = vector.broadcast %61 : vector<16x1xf32> to vector<16x16xf32>
    %63 = arith.subf %59, %62 : vector<16x16xf32>
    %64 = math.exp %63 : vector<16x16xf32>
    %cst_31 = arith.constant dense<0.000000e+00> : vector<16xf32>
    %65 = vector.multi_reduction <add>, %64, %cst_31 [1] : vector<16x16xf32> to vector<16xf32>
    %66 = vector.shape_cast %65 : vector<16xf32> to vector<16x1xf32>
    %67 = tpu.reciprocal %66 {approx = true} : vector<16x1xf32> -> vector<16x1xf32>
    %68 = vector.broadcast %67 : vector<16x1xf32> to vector<16x16xf32>
    %69 = arith.mulf %64, %68 : vector<16x16xf32>
    %70 = arith.truncf %69 : vector<16x16xf32> to vector<16x16xbf16>
    %71 = arith.truncf %43 : vector<16x32xf32> to vector<16x32xbf16>
    %cst_32 = arith.constant dense<0.000000e+00> : vector<16x32xf32>
    %72 = tpu.matmul %70, %71, %cst_32 {dimension_numbers = #tpu.dot_dimension_numbers<[1], [0], [0], [1], [0, 0, 1, 1], [], []>} : vector<16x16xbf16>, vector<16x32xbf16>, vector<16x32xf32> -> vector<16x32xf32>
    %cst_33 = arith.constant 0.000000e+00 : f32
    %73 = vector.broadcast %cst_33 : f32 to vector<16x32xf32>
    %74 = arith.cmpf ogt, %72, %73 : vector<16x32xf32>
    %75 = math.exp %72 : vector<16x32xf32>
    %cst_34 = arith.constant 1.000000e+00 : f32
    %76 = vector.broadcast %cst_34 : f32 to vector<16x32xf32>
    %77 = arith.subf %75, %76 : vector<16x32xf32>
    %78 = arith.select %74, %72, %77 : vector<16x32xi1>, vector<16x32xf32>
    %79 = arith.truncf %78 : vector<16x32xf32> to vector<16x32xbf16>
    %c0_35 = arith.constant 0 : index
    %c0_36 = arith.constant 0 : index
    %c0_37 = arith.constant 0 : index
    %80 = vector.load %arg9[%c0_35, %c0_36, %c0_37] : memref<3x32x8xbf16, #tpu.memory_space<vmem>>, vector<1x32x8xbf16>
    %81 = vector.shape_cast %80 : vector<1x32x8xbf16> to vector<32x8xbf16>
    %cst_38 = arith.constant dense<0.000000e+00> : vector<16x8xf32>
    %82 = tpu.matmul %79, %81, %cst_38 {dimension_numbers = #tpu.dot_dimension_numbers<[1], [0], [0], [1], [0, 0, 1, 1], [], []>} : vector<16x32xbf16>, vector<32x8xbf16>, vector<16x8xf32> -> vector<16x8xf32>
    %c1 = arith.constant 1 : index
    %c0_39 = arith.constant 0 : index
    %c0_40 = arith.constant 0 : index
    %83 = vector.load %arg9[%c1, %c0_39, %c0_40] : memref<3x32x8xbf16, #tpu.memory_space<vmem>>, vector<1x32x8xbf16>
    %84 = vector.shape_cast %83 : vector<1x32x8xbf16> to vector<32x8xbf16>
    %cst_41 = arith.constant dense<0.000000e+00> : vector<16x8xf32>
    %85 = tpu.matmul %79, %84, %cst_41 {dimension_numbers = #tpu.dot_dimension_numbers<[1], [0], [0], [1], [0, 0, 1, 1], [], []>} : vector<16x32xbf16>, vector<32x8xbf16>, vector<16x8xf32> -> vector<16x8xf32>
    %c2 = arith.constant 2 : index
    %c0_42 = arith.constant 0 : index
    %c0_43 = arith.constant 0 : index
    %86 = vector.load %arg9[%c2, %c0_42, %c0_43] : memref<3x32x8xbf16, #tpu.memory_space<vmem>>, vector<1x32x8xbf16>
    %87 = vector.shape_cast %86 : vector<1x32x8xbf16> to vector<32x8xbf16>
    %cst_44 = arith.constant dense<0.000000e+00> : vector<16x8xf32>
    %88 = tpu.matmul %79, %87, %cst_44 {dimension_numbers = #tpu.dot_dimension_numbers<[1], [0], [0], [1], [0, 0, 1, 1], [], []>} : vector<16x32xbf16>, vector<32x8xbf16>, vector<16x8xf32> -> vector<16x8xf32>
    %89 = arith.truncf %82 : vector<16x8xf32> to vector<16x8xbf16>
    %90 = arith.truncf %85 : vector<16x8xf32> to vector<16x8xbf16>
    %cst_45 = arith.constant dense<0.000000e+00> : vector<16x16xf32>
    %91 = tpu.matmul %89, %90, %cst_45 {dimension_numbers = #tpu.dot_dimension_numbers<[1], [1], [0], [0], [0, 0, 1, 0], [], []>} : vector<16x8xbf16>, vector<16x8xbf16>, vector<16x16xf32> -> vector<16x16xf32>
    %cst_46 = arith.constant 0.353553385 : f32
    %92 = vector.broadcast %cst_46 : f32 to vector<16x16xf32>
    %93 = arith.mulf %91, %92 : vector<16x16xf32>
    %cst_47 = arith.constant dense<0xFF800000> : vector<16xf32>
    %94 = vector.multi_reduction <maximumf>, %93, %cst_47 [1] : vector<16x16xf32> to vector<16xf32>
    %95 = vector.shape_cast %94 : vector<16xf32> to vector<16x1xf32>
    %96 = vector.broadcast %95 : vector<16x1xf32> to vector<16x16xf32>
    %97 = arith.subf %93, %96 : vector<16x16xf32>
    %98 = math.exp %97 : vector<16x16xf32>
    %cst_48 = arith.constant dense<0.000000e+00> : vector<16xf32>
    %99 = vector.multi_reduction <add>, %98, %cst_48 [1] : vector<16x16xf32> to vector<16xf32>
    %100 = vector.shape_cast %99 : vector<16xf32> to vector<16x1xf32>
    %101 = tpu.reciprocal %100 {approx = true} : vector<16x1xf32> -> vector<16x1xf32>
    %102 = vector.broadcast %101 : vector<16x1xf32> to vector<16x16xf32>
    %103 = arith.mulf %98, %102 : vector<16x16xf32>
    %104 = arith.truncf %103 : vector<16x16xf32> to vector<16x16xbf16>
    %105 = arith.truncf %88 : vector<16x8xf32> to vector<16x8xbf16>
    %cst_49 = arith.constant dense<0.000000e+00> : vector<16x8xf32>
    %106 = tpu.matmul %104, %105, %cst_49 {dimension_numbers = #tpu.dot_dimension_numbers<[1], [0], [0], [1], [0, 0, 1, 1], [], []>} : vector<16x16xbf16>, vector<16x8xbf16>, vector<16x8xf32> -> vector<16x8xf32>
    %107 = arith.truncf %106 : vector<16x8xf32> to vector<16x8xbf16>
    %c0_50 = arith.constant 0 : index
    %c0_51 = arith.constant 0 : index
    %108 = vector.load %arg10[%c0_50, %c0_51] : memref<8x32xbf16, #tpu.memory_space<vmem>>, vector<8x32xbf16>
    %cst_52 = arith.constant dense<0.000000e+00> : vector<16x32xf32>
    %109 = tpu.matmul %107, %108, %cst_52 {dimension_numbers = #tpu.dot_dimension_numbers<[1], [0], [0], [1], [0, 0, 1, 1], [], []>} : vector<16x8xbf16>, vector<8x32xbf16>, vector<16x32xf32> -> vector<16x32xf32>
    %c0_53 = arith.constant 0 : index
    %c0_54 = arith.constant 0 : index
    %110 = vector.load %arg11[%c0_53, %c0_54] : memref<1x32xf32, #tpu.memory_space<vmem>>, vector<1x32xf32>
    %111 = vector.broadcast %110 : vector<1x32xf32> to vector<16x32xf32>
    %112 = arith.mulf %109, %111 : vector<16x32xf32>
    %cst_55 = arith.constant dense<0.000000e+00> : vector<16xf32>
    %113 = vector.multi_reduction <add>, %112, %cst_55 [1] : vector<16x32xf32> to vector<16xf32>
    %114 = vector.shape_cast %113 : vector<16xf32> to vector<16x1xf32>
    %c0_56 = arith.constant 0 : index
    %c0_57 = arith.constant 0 : index
    %115 = vector.load %arg12[%c0_56, %c0_57] : memref<1x32xf32, #tpu.memory_space<vmem>>, vector<1x32xf32>
    %cst_58 = arith.constant dense<0.000000e+00> : vector<1x16xf32>
    %116 = tpu.matmul %115, %109, %cst_58 {dimension_numbers = #tpu.dot_dimension_numbers<[1], [1], [0], [0], [0, 0, 1, 0], [], []>} : vector<1x32xf32>, vector<16x32xf32>, vector<1x16xf32> -> vector<1x16xf32>
    %117 = vector.broadcast %114 : vector<16x1xf32> to vector<16x16xf32>
    %118 = vector.broadcast %116 : vector<1x16xf32> to vector<16x16xf32>
    %119 = arith.addf %117, %118 : vector<16x16xf32>
    %cst_59 = arith.constant 0.000000e+00 : f32
    %120 = vector.broadcast %cst_59 : f32 to vector<16x16xf32>
    %121 = arith.cmpf ogt, %119, %120 : vector<16x16xf32>
    %cst_60 = arith.constant 2.000000e-01 : f32
    %122 = vector.broadcast %cst_60 : f32 to vector<16x16xf32>
    %123 = arith.mulf %122, %119 : vector<16x16xf32>
    %124 = arith.select %121, %119, %123 : vector<16x16xi1>, vector<16x16xf32>
    %125 = arith.addf %124, %2 : vector<16x16xf32>
    %cst_61 = arith.constant dense<0xFF800000> : vector<16xf32>
    %126 = vector.multi_reduction <maximumf>, %125, %cst_61 [1] : vector<16x16xf32> to vector<16xf32>
    %127 = vector.shape_cast %126 : vector<16xf32> to vector<16x1xf32>
    %128 = vector.broadcast %127 : vector<16x1xf32> to vector<16x16xf32>
    %129 = arith.subf %125, %128 : vector<16x16xf32>
    %130 = math.exp %129 : vector<16x16xf32>
    %cst_62 = arith.constant dense<0.000000e+00> : vector<16xf32>
    %131 = vector.multi_reduction <add>, %130, %cst_62 [1] : vector<16x16xf32> to vector<16xf32>
    %132 = vector.shape_cast %131 : vector<16xf32> to vector<16x1xf32>
    %133 = tpu.reciprocal %132 {approx = true} : vector<16x1xf32> -> vector<16x1xf32>
    %134 = vector.broadcast %133 : vector<16x1xf32> to vector<16x16xf32>
    %135 = arith.mulf %130, %134 : vector<16x16xf32>
    %136 = arith.truncf %135 : vector<16x16xf32> to vector<16x16xbf16>
    %137 = arith.truncf %109 : vector<16x32xf32> to vector<16x32xbf16>
    %cst_63 = arith.constant dense<0.000000e+00> : vector<16x32xf32>
    %138 = tpu.matmul %136, %137, %cst_63 {dimension_numbers = #tpu.dot_dimension_numbers<[1], [0], [0], [1], [0, 0, 1, 1], [], []>} : vector<16x16xbf16>, vector<16x32xbf16>, vector<16x32xf32> -> vector<16x32xf32>
    %cst_64 = arith.constant 0.000000e+00 : f32
    %139 = vector.broadcast %cst_64 : f32 to vector<16x32xf32>
    %140 = arith.cmpf ogt, %138, %139 : vector<16x32xf32>
    %141 = math.exp %138 : vector<16x32xf32>
    %cst_65 = arith.constant 1.000000e+00 : f32
    %142 = vector.broadcast %cst_65 : f32 to vector<16x32xf32>
    %143 = arith.subf %141, %142 : vector<16x32xf32>
    %144 = arith.select %140, %138, %143 : vector<16x32xi1>, vector<16x32xf32>
    %145 = arith.truncf %144 : vector<16x32xf32> to vector<16x32xbf16>
    %c0_66 = arith.constant 0 : index
    %c0_67 = arith.constant 0 : index
    %146 = vector.load %arg13[%c0_66, %c0_67] : memref<32x32xbf16, #tpu.memory_space<vmem>>, vector<32x32xbf16>
    %cst_68 = arith.constant dense<0.000000e+00> : vector<16x32xf32>
    %147 = tpu.matmul %145, %146, %cst_68 {dimension_numbers = #tpu.dot_dimension_numbers<[1], [0], [0], [1], [0, 0, 1, 1], [], []>} : vector<16x32xbf16>, vector<32x32xbf16>, vector<16x32xf32> -> vector<16x32xf32>
    %c0_69 = arith.constant 0 : index
    %c0_70 = arith.constant 0 : index
    %148 = vector.load %arg14[%c0_69, %c0_70] : memref<1x32xf32, #tpu.memory_space<vmem>>, vector<1x32xf32>
    %149 = vector.broadcast %148 : vector<1x32xf32> to vector<16x32xf32>
    %150 = arith.mulf %147, %149 : vector<16x32xf32>
    %cst_71 = arith.constant dense<0.000000e+00> : vector<16xf32>
    %151 = vector.multi_reduction <add>, %150, %cst_71 [1] : vector<16x32xf32> to vector<16xf32>
    %152 = vector.shape_cast %151 : vector<16xf32> to vector<16x1xf32>
    %c0_72 = arith.constant 0 : index
    %c0_73 = arith.constant 0 : index
    %153 = vector.load %arg15[%c0_72, %c0_73] : memref<1x32xf32, #tpu.memory_space<vmem>>, vector<1x32xf32>
    %cst_74 = arith.constant dense<0.000000e+00> : vector<1x16xf32>
    %154 = tpu.matmul %153, %147, %cst_74 {dimension_numbers = #tpu.dot_dimension_numbers<[1], [1], [0], [0], [0, 0, 1, 0], [], []>} : vector<1x32xf32>, vector<16x32xf32>, vector<1x16xf32> -> vector<1x16xf32>
    %155 = vector.broadcast %152 : vector<16x1xf32> to vector<16x16xf32>
    %156 = vector.broadcast %154 : vector<1x16xf32> to vector<16x16xf32>
    %157 = arith.addf %155, %156 : vector<16x16xf32>
    %cst_75 = arith.constant 0.000000e+00 : f32
    %158 = vector.broadcast %cst_75 : f32 to vector<16x16xf32>
    %159 = arith.cmpf ogt, %157, %158 : vector<16x16xf32>
    %cst_76 = arith.constant 2.000000e-01 : f32
    %160 = vector.broadcast %cst_76 : f32 to vector<16x16xf32>
    %161 = arith.mulf %160, %157 : vector<16x16xf32>
    %162 = arith.select %159, %157, %161 : vector<16x16xi1>, vector<16x16xf32>
    %163 = arith.addf %162, %2 : vector<16x16xf32>
    %cst_77 = arith.constant dense<0xFF800000> : vector<16xf32>
    %164 = vector.multi_reduction <maximumf>, %163, %cst_77 [1] : vector<16x16xf32> to vector<16xf32>
    %165 = vector.shape_cast %164 : vector<16xf32> to vector<16x1xf32>
    %166 = vector.broadcast %165 : vector<16x1xf32> to vector<16x16xf32>
    %167 = arith.subf %163, %166 : vector<16x16xf32>
    %168 = math.exp %167 : vector<16x16xf32>
    %cst_78 = arith.constant dense<0.000000e+00> : vector<16xf32>
    %169 = vector.multi_reduction <add>, %168, %cst_78 [1] : vector<16x16xf32> to vector<16xf32>
    %170 = vector.shape_cast %169 : vector<16xf32> to vector<16x1xf32>
    %171 = tpu.reciprocal %170 {approx = true} : vector<16x1xf32> -> vector<16x1xf32>
    %172 = vector.broadcast %171 : vector<16x1xf32> to vector<16x16xf32>
    %173 = arith.mulf %168, %172 : vector<16x16xf32>
    %174 = arith.truncf %173 : vector<16x16xf32> to vector<16x16xbf16>
    %175 = arith.truncf %147 : vector<16x32xf32> to vector<16x32xbf16>
    %cst_79 = arith.constant dense<0.000000e+00> : vector<16x32xf32>
    %176 = tpu.matmul %174, %175, %cst_79 {dimension_numbers = #tpu.dot_dimension_numbers<[1], [0], [0], [1], [0, 0, 1, 1], [], []>} : vector<16x16xbf16>, vector<16x32xbf16>, vector<16x32xf32> -> vector<16x32xf32>
    %cst_80 = arith.constant 0.000000e+00 : f32
    %177 = vector.broadcast %cst_80 : f32 to vector<16x32xf32>
    %178 = arith.cmpf ogt, %176, %177 : vector<16x32xf32>
    %179 = math.exp %176 : vector<16x32xf32>
    %cst_81 = arith.constant 1.000000e+00 : f32
    %180 = vector.broadcast %cst_81 : f32 to vector<16x32xf32>
    %181 = arith.subf %179, %180 : vector<16x32xf32>
    %182 = arith.select %178, %176, %181 : vector<16x32xi1>, vector<16x32xf32>
    %cst_82 = arith.constant 0.000000e+00 : f32
    %183 = vector.broadcast %cst_82 : f32 to vector<32x32xf32>
    %c0_83 = arith.constant 0 : index
    %c0_84 = arith.constant 0 : index
    %184 = vector.load %arg21[%c0_83, %c0_84] : memref<32x32xf32, #tpu.memory_space<vmem>>, vector<32x32xf32>
    tpu.vector_store %arg21[%c0_83, %c0_84], %183 {strides = array<i32>} : memref<32x32xf32, #tpu.memory_space<vmem>>, vector<32x32xf32>,
    %c8 = arith.constant 8 : index
    %c0_85 = arith.constant 0 : index
    %185 = vector.load %arg21[%c8, %c0_85] : memref<32x32xf32, #tpu.memory_space<vmem>>, vector<16x32xf32>
    tpu.vector_store %arg21[%c8, %c0_85], %182 {strides = array<i32>} : memref<32x32xf32, #tpu.memory_space<vmem>>, vector<16x32xf32>,
    %c7 = arith.constant 7 : index
    %c0_86 = arith.constant 0 : index
    %186 = vector.load %arg21[%c7, %c0_86] : memref<32x32xf32, #tpu.memory_space<vmem>>, vector<16x32xf32>
    %c9 = arith.constant 9 : index
    %c0_87 = arith.constant 0 : index
    %187 = vector.load %arg21[%c9, %c0_87] : memref<32x32xf32, #tpu.memory_space<vmem>>, vector<16x32xf32>
    %188 = arith.truncf %186 : vector<16x32xf32> to vector<16x32xbf16>
    %c0_88 = arith.constant 0 : index
    %c0_89 = arith.constant 0 : index
    %189 = vector.load %arg16[%c0_88, %c0_89] : memref<32x4xbf16, #tpu.memory_space<vmem>>, vector<32x4xbf16>
    %cst_90 = arith.constant dense<0.000000e+00> : vector<16x4xf32>
    %190 = tpu.matmul %188, %189, %cst_90 {dimension_numbers = #tpu.dot_dimension_numbers<[1], [0], [0], [1], [0, 0, 1, 1], [], []>} : vector<16x32xbf16>, vector<32x4xbf16>, vector<16x4xf32> -> vector<16x4xf32>
    %191 = arith.truncf %182 : vector<16x32xf32> to vector<16x32xbf16>
    %c0_91 = arith.constant 0 : index
    %c0_92 = arith.constant 0 : index
    %192 = vector.load %arg17[%c0_91, %c0_92] : memref<32x4xbf16, #tpu.memory_space<vmem>>, vector<32x4xbf16>
    %cst_93 = arith.constant dense<0.000000e+00> : vector<16x4xf32>
    %193 = tpu.matmul %191, %192, %cst_93 {dimension_numbers = #tpu.dot_dimension_numbers<[1], [0], [0], [1], [0, 0, 1, 1], [], []>} : vector<16x32xbf16>, vector<32x4xbf16>, vector<16x4xf32> -> vector<16x4xf32>
    %194 = arith.addf %190, %193 : vector<16x4xf32>
    %195 = arith.truncf %187 : vector<16x32xf32> to vector<16x32xbf16>
    %c0_94 = arith.constant 0 : index
    %c0_95 = arith.constant 0 : index
    %196 = vector.load %arg18[%c0_94, %c0_95] : memref<32x4xbf16, #tpu.memory_space<vmem>>, vector<32x4xbf16>
    %cst_96 = arith.constant dense<0.000000e+00> : vector<16x4xf32>
    %197 = tpu.matmul %195, %196, %cst_96 {dimension_numbers = #tpu.dot_dimension_numbers<[1], [0], [0], [1], [0, 0, 1, 1], [], []>} : vector<16x32xbf16>, vector<32x4xbf16>, vector<16x4xf32> -> vector<16x4xf32>
    %198 = arith.addf %194, %197 : vector<16x4xf32>
    %c0_97 = arith.constant 0 : index
    %c0_98 = arith.constant 0 : index
    %199 = vector.load %arg19[%c0_97, %c0_98] : memref<1x4xf32, #tpu.memory_space<vmem>>, vector<1x4xf32>
    %200 = vector.broadcast %199 : vector<1x4xf32> to vector<16x4xf32>
    %201 = arith.addf %198, %200 : vector<16x4xf32>
    %c0_99 = arith.constant 0 : index
    %c0_100 = arith.constant 0 : index
    %c0_101 = arith.constant 0 : index
    %202 = vector.load %arg20[%c0_99, %c0_100, %c0_101] : memref<1x16x4xf32, #tpu.memory_space<vmem>>, vector<1x16x4xf32>
    %203 = vector.shape_cast %202 : vector<1x16x4xf32> to vector<16x4xf32>
    %204 = vector.shape_cast %201 : vector<16x4xf32> to vector<1x16x4xf32>
    tpu.vector_store %arg20[%c0_99, %c0_100, %c0_101], %204 {strides = array<i32>} : memref<1x16x4xf32, #tpu.memory_space<vmem>>, vector<1x16x4xf32>,
    return
  }
  func.func @transform_0(%arg0: i32) -> (i32, i32, i32) {
    %c0_i32 = arith.constant 0 : i32
    %c0_i32_0 = arith.constant 0 : i32
    %c0_i32_1 = arith.constant 0 : i32
    return %arg0, %c0_i32, %c0_i32_0 : i32, i32, i32
  }
  func.func @transform_1(%arg0: i32) -> (i32, i32) {
    %c0_i32 = arith.constant 0 : i32
    %c0_i32_0 = arith.constant 0 : i32
    %c0_i32_1 = arith.constant 0 : i32
    return %c0_i32, %c0_i32_0 : i32, i32
  }
  func.func @transform_2(%arg0: i32) -> (i32, i32) {
    %c0_i32 = arith.constant 0 : i32
    %c0_i32_0 = arith.constant 0 : i32
    %c0_i32_1 = arith.constant 0 : i32
    return %c0_i32, %c0_i32_0 : i32, i32
  }
  func.func @transform_3(%arg0: i32) -> (i32, i32) {
    %c0_i32 = arith.constant 0 : i32
    %c0_i32_0 = arith.constant 0 : i32
    %c0_i32_1 = arith.constant 0 : i32
    return %c0_i32, %c0_i32_0 : i32, i32
  }
  func.func @transform_4(%arg0: i32) -> (i32, i32) {
    %c0_i32 = arith.constant 0 : i32
    %c0_i32_0 = arith.constant 0 : i32
    %c0_i32_1 = arith.constant 0 : i32
    return %c0_i32, %c0_i32_0 : i32, i32
  }
  func.func @transform_5(%arg0: i32) -> (i32, i32) {
    %c0_i32 = arith.constant 0 : i32
    %c0_i32_0 = arith.constant 0 : i32
    %c0_i32_1 = arith.constant 0 : i32
    return %c0_i32, %c0_i32_0 : i32, i32
  }
  func.func @transform_6(%arg0: i32) -> (i32, i32) {
    %c0_i32 = arith.constant 0 : i32
    %c0_i32_0 = arith.constant 0 : i32
    %c0_i32_1 = arith.constant 0 : i32
    return %c0_i32, %c0_i32_0 : i32, i32
  }
  func.func @transform_7(%arg0: i32) -> (i32, i32) {
    %c0_i32 = arith.constant 0 : i32
    %c0_i32_0 = arith.constant 0 : i32
    %c0_i32_1 = arith.constant 0 : i32
    return %c0_i32, %c0_i32_0 : i32, i32
  }
  func.func @transform_8(%arg0: i32) -> (i32, i32, i32) {
    %c0_i32 = arith.constant 0 : i32
    %c0_i32_0 = arith.constant 0 : i32
    %c0_i32_1 = arith.constant 0 : i32
    %c0_i32_2 = arith.constant 0 : i32
    return %c0_i32, %c0_i32_0, %c0_i32_1 : i32, i32, i32
  }
  func.func @transform_9(%arg0: i32) -> (i32, i32) {
    %c0_i32 = arith.constant 0 : i32
    %c0_i32_0 = arith.constant 0 : i32
    %c0_i32_1 = arith.constant 0 : i32
    return %c0_i32, %c0_i32_0 : i32, i32
  }
  func.func @transform_10(%arg0: i32) -> (i32, i32) {
    %c0_i32 = arith.constant 0 : i32
    %c0_i32_0 = arith.constant 0 : i32
    %c0_i32_1 = arith.constant 0 : i32
    return %c0_i32, %c0_i32_0 : i32, i32
  }
  func.func @transform_11(%arg0: i32) -> (i32, i32) {
    %c0_i32 = arith.constant 0 : i32
    %c0_i32_0 = arith.constant 0 : i32
    %c0_i32_1 = arith.constant 0 : i32
    return %c0_i32, %c0_i32_0 : i32, i32
  }
  func.func @transform_12(%arg0: i32) -> (i32, i32) {
    %c0_i32 = arith.constant 0 : i32
    %c0_i32_0 = arith.constant 0 : i32
    %c0_i32_1 = arith.constant 0 : i32
    return %c0_i32, %c0_i32_0 : i32, i32
  }
  func.func @transform_13(%arg0: i32) -> (i32, i32) {
    %c0_i32 = arith.constant 0 : i32
    %c0_i32_0 = arith.constant 0 : i32
    %c0_i32_1 = arith.constant 0 : i32
    return %c0_i32, %c0_i32_0 : i32, i32
  }
  func.func @transform_14(%arg0: i32) -> (i32, i32) {
    %c0_i32 = arith.constant 0 : i32
    %c0_i32_0 = arith.constant 0 : i32
    %c0_i32_1 = arith.constant 0 : i32
    return %c0_i32, %c0_i32_0 : i32, i32
  }
  func.func @transform_15(%arg0: i32) -> (i32, i32) {
    %c0_i32 = arith.constant 0 : i32
    %c0_i32_0 = arith.constant 0 : i32
    %c0_i32_1 = arith.constant 0 : i32
    return %c0_i32, %c0_i32_0 : i32, i32
  }
  func.func @transform_16(%arg0: i32) -> (i32, i32) {
    %c0_i32 = arith.constant 0 : i32
    %c0_i32_0 = arith.constant 0 : i32
    %c0_i32_1 = arith.constant 0 : i32
    return %c0_i32, %c0_i32_0 : i32, i32
  }
  func.func @transform_17(%arg0: i32) -> (i32, i32) {
    %c0_i32 = arith.constant 0 : i32
    %c0_i32_0 = arith.constant 0 : i32
    %c0_i32_1 = arith.constant 0 : i32
    return %c0_i32, %c0_i32_0 : i32, i32
  }
  func.func @transform_18(%arg0: i32) -> (i32, i32) {
    %c0_i32 = arith.constant 0 : i32
    %c0_i32_0 = arith.constant 0 : i32
    %c0_i32_1 = arith.constant 0 : i32
    return %c0_i32, %c0_i32_0 : i32, i32
  }
  func.func @transform_19(%arg0: i32) -> (i32, i32, i32) {
    %c0_i32 = arith.constant 0 : i32
    %c0_i32_0 = arith.constant 0 : i32
    %c0_i32_1 = arith.constant 0 : i32
    return %arg0, %c0_i32, %c0_i32_0 : i32, i32, i32
  }
}

</mosaic_0001>

<llo_original>
// kernel: stf_informer_forward.1
$region0: #{stf_informer_forward.1}
  #allocation0 [shape = 'u32[]', space=smem, size = 0x4, offset = 0x4, fixed_abs, tag = 'smem constant byte address 0x4 - core index']
  #allocation1 [shape = 'u32[144,128]{1,0:T(1,128)}', space=vmem, size = 0x12000, scoped, tag = 'internal scratch']
  #allocation2 [shape = 'f32[32,32]{1,0:T(8,128)}', space=vmem, size = 0x4000, scoped, tag = 'scratch operand']
  %s0 = inlined_call_operand.vmem [shape: f32[2,16,8], index: 0, kind: input, shape index: {}]
  %s1 = inlined_call_operand.vmem [shape: f32[16,16], index: 1, kind: input, shape index: {}]
  %s2 = inlined_call_operand.vmem [shape: bf16[8,32], index: 2, kind: input, shape index: {}]
  %s3 = inlined_call_operand.vmem [shape: f32[1,32], index: 3, kind: input, shape index: {}]
  %s4 = inlined_call_operand.vmem [shape: f32[1,32], index: 4, kind: input, shape index: {}]
  %s5 = inlined_call_operand.vmem [shape: bf16[32,32], index: 5, kind: input, shape index: {}]
  %s6 = inlined_call_operand.vmem [shape: f32[1,32], index: 6, kind: input, shape index: {}]
  %s7 = inlined_call_operand.vmem [shape: f32[1,32], index: 7, kind: input, shape index: {}]
  %s8 = inlined_call_operand.vmem [shape: bf16[3,32,8], index: 8, kind: input, shape index: {}]
  %s9 = inlined_call_operand.vmem [shape: bf16[8,32], index: 9, kind: input, shape index: {}]
  %s10 = inlined_call_operand.vmem [shape: f32[1,32], index: 10, kind: input, shape index: {}]
  %s11 = inlined_call_operand.vmem [shape: f32[1,32], index: 11, kind: input, shape index: {}]
  %s12 = inlined_call_operand.vmem [shape: bf16[32,32], index: 12, kind: input, shape index: {}]
  %s13 = inlined_call_operand.vmem [shape: f32[1,32], index: 13, kind: input, shape index: {}]
  %s14 = inlined_call_operand.vmem [shape: f32[1,32], index: 14, kind: input, shape index: {}]
  %s15 = inlined_call_operand.vmem [shape: bf16[32,4], index: 15, kind: input, shape index: {}]
  %s16 = inlined_call_operand.vmem [shape: bf16[32,4], index: 16, kind: input, shape index: {}]
  %s17 = inlined_call_operand.vmem [shape: bf16[32,4], index: 17, kind: input, shape index: {}]
  %s18 = inlined_call_operand.vmem [shape: f32[1,4], index: 18, kind: input, shape index: {}]
  %s19 = inlined_call_operand.vmem [shape: f32[2,16,4], index: 19, kind: output, shape index: {}]
  %s20 = sld [smem:[#allocation0]]
  $region109: #{stf_informer_forward.1} parent=0
    _
  %s22 = ssub.s32 1, %s20
  %s23 = scalar_select 0, %s22, %s20
  loop: start=0, step=1, limit=4
  $region2: #{stf_informer_forward.1} parent=0 // loop_pre_header
    _
  $region3: #{stf_informer_forward.1} parent=0 // loop_header
    %s25 = sphi 0, %s29
    %p26 = scmp.ge.s32.totalorder %s25, 4
    %s35 = sphi 0, %s37
    %s38 = sphi 0, %s35
    %s39 = sphi 0, %s38
    %s55 = sphi 0, %s39
    %s59 = sphi 0, %s59
    %s61 = sphi 0, %s59
    %s62 = sphi 0, %s61
    %s76 = sphi 0, %s62
    %s80 = sphi 0, %s80
    %s82 = sphi 0, %s80
    %s83 = sphi 0, %s82
    %s97 = sphi 0, %s83
    %s101 = sphi 0, %s101
    %s103 = sphi 0, %s101
    %s104 = sphi 0, %s103
    %s118 = sphi 0, %s104
    %s122 = sphi 0, %s122
    %s124 = sphi 0, %s122
    %s125 = sphi 0, %s124
    %s139 = sphi 0, %s125
    %s143 = sphi 0, %s143
    %s145 = sphi 0, %s143
    %s146 = sphi 0, %s145
    %s160 = sphi 0, %s146
    %s164 = sphi 0, %s164
    %s166 = sphi 0, %s164
    %s167 = sphi 0, %s166
    %s181 = sphi 0, %s167
    %s185 = sphi 0, %s185
    %s187 = sphi 0, %s185
    %s188 = sphi 0, %s187
    %s202 = sphi 0, %s188
    %s206 = sphi 0, %s206
    %s208 = sphi 0, %s206
    %s209 = sphi 0, %s208
    %s223 = sphi 0, %s209
    %s227 = sphi 0, %s227
    %s229 = sphi 0, %s227
    %s230 = sphi 0, %s229
    %s244 = sphi 0, %s230
    %s248 = sphi 0, %s248
    %s250 = sphi 0, %s248
    %s251 = sphi 0, %s250
    %s265 = sphi 0, %s251
    %s269 = sphi 0, %s269
    %s271 = sphi 0, %s269
    %s272 = sphi 0, %s271
    %s286 = sphi 0, %s272
    %s290 = sphi 0, %s290
    %s292 = sphi 0, %s290
    %s293 = sphi 0, %s292
    %s307 = sphi 0, %s293
    %s311 = sphi 0, %s311
    %s313 = sphi 0, %s311
    %s314 = sphi 0, %s313
    %s328 = sphi 0, %s314
    %s332 = sphi 0, %s332
    %s334 = sphi 0, %s332
    %s335 = sphi 0, %s334
    %s349 = sphi 0, %s335
    %s353 = sphi 0, %s353
    %s355 = sphi 0, %s353
    %s356 = sphi 0, %s355
    %s370 = sphi 0, %s356
    %s374 = sphi 0, %s374
    %s376 = sphi 0, %s374
    %s377 = sphi 0, %s376
    %s391 = sphi 0, %s377
    %s395 = sphi 0, %s395
    %s397 = sphi 0, %s395
    %s398 = sphi 0, %s397
    %s412 = sphi 0, %s398
    %s416 = sphi 0, %s416
    %s418 = sphi 0, %s416
    %s419 = sphi 0, %s418
    %s433 = sphi 0, %s419
    %s439 = sphi 0, %s441
    %s442 = sphi 0, %s439
    %s443 = sphi 0, %s442
    %s459 = sphi 0, %s443
  $region4: #{stf_informer_forward.1} parent=0 // loop_header_branch
    %28 = sbr.rel (%p26) target = $region8
  $region5: #{stf_informer_forward.1} parent=0 // loop_body
    %s30 = ssub.s32 %s25, 1
    %s31 = ssub.s32 %s25, 2
    %s32 = sadd.s32 %s25, 1
    %s33 = ssub.s32 %s25, %s32
    %p34 = scmp.eq.s32.totalorder %s33, 0
    %s36 = sadd.s32 %s35, 1
    %s37 = scalar_select %p34, %s35, %s36
    %p40 = pneg %p34
    %p41 = scmp.eq.s32.totalorder %s25, 1
    %p42 = por %p40, %p41
    %p43 = scmp.ne.s32.totalorder %s35, %s38
    %p44 = scmp.eq.s32.totalorder %s25, 0
    %p45 = por %p43, %p44
    %p46 = scmp.ne.s32.totalorder %s35, %s38
    %p47 = scmp.eq.s32.totalorder %s30, 1
    %p48 = por %p46, %p47
    %p49 = scmp.ne.s32.totalorder %s38, %s39
    %p50 = scmp.eq.s32.totalorder %s30, 0
    %p51 = por %p49, %p50
    %p52 = scmp.ne.s32.totalorder %s38, %s39
    %p53 = scmp.eq.s32.totalorder %s31, 1
    %p54 = por %p52, %p53
    %p56 = scmp.ne.s32.totalorder %s39, %s55
    %p57 = scmp.eq.s32.totalorder %s31, 0
    %p58 = por %p56, %p57
    %s60 = sadd.s32 %s59, 1
    %p63 = scmp.eq.s32.totalorder %s25, 1
    %p64 = scmp.ne.s32.totalorder %s59, %s61
    %p65 = scmp.eq.s32.totalorder %s25, 0
    %p66 = por %p64, %p65
    %p67 = scmp.ne.s32.totalorder %s59, %s61
    %p68 = scmp.eq.s32.totalorder %s30, 1
    %p69 = por %p67, %p68
    %p70 = scmp.ne.s32.totalorder %s61, %s62
    %p71 = scmp.eq.s32.totalorder %s30, 0
    %p72 = por %p70, %p71
    %p73 = scmp.ne.s32.totalorder %s61, %s62
    %p74 = scmp.eq.s32.totalorder %s31, 1
    %p75 = por %p73, %p74
    %p77 = scmp.ne.s32.totalorder %s62, %s76
    %p78 = scmp.eq.s32.totalorder %s31, 0
    %p79 = por %p77, %p78
    %s81 = sadd.s32 %s80, 1
    %p84 = scmp.eq.s32.totalorder %s25, 1
    %p85 = scmp.ne.s32.totalorder %s80, %s82
    %p86 = scmp.eq.s32.totalorder %s25, 0
    %p87 = por %p85, %p86
    %p88 = scmp.ne.s32.totalorder %s80, %s82
    %p89 = scmp.eq.s32.totalorder %s30, 1
    %p90 = por %p88, %p89
    %p91 = scmp.ne.s32.totalorder %s82, %s83
    %p92 = scmp.eq.s32.totalorder %s30, 0
    %p93 = por %p91, %p92
    %p94 = scmp.ne.s32.totalorder %s82, %s83
    %p95 = scmp.eq.s32.totalorder %s31, 1
    %p96 = por %p94, %p95
    %p98 = scmp.ne.s32.totalorder %s83, %s97
    %p99 = scmp.eq.s32.totalorder %s31, 0
    %p100 = por %p98, %p99
    %s102 = sadd.s32 %s101, 1
    %p105 = scmp.eq.s32.totalorder %s25, 1
    %p106 = scmp.ne.s32.totalorder %s101, %s103
    %p107 = scmp.eq.s32.totalorder %s25, 0
    %p108 = por %p106, %p107
    %p109 = scmp.ne.s32.totalorder %s101, %s103
    %p110 = scmp.eq.s32.totalorder %s30, 1
    %p111 = por %p109, %p110
    %p112 = scmp.ne.s32.totalorder %s103, %s104
    %p113 = scmp.eq.s32.totalorder %s30, 0
    %p114 = por %p112, %p113
    %p115 = scmp.ne.s32.totalorder %s103, %s104
    %p116 = scmp.eq.s32.totalorder %s31, 1
    %p117 = por %p115, %p116
    %p119 = scmp.ne.s32.totalorder %s104, %s118
    %p120 = scmp.eq.s32.totalorder %s31, 0
    %p121 = por %p119, %p120
    %s123 = sadd.s32 %s122, 1
    %p126 = scmp.eq.s32.totalorder %s25, 1
    %p127 = scmp.ne.s32.totalorder %s122, %s124
    %p128 = scmp.eq.s32.totalorder %s25, 0
    %p129 = por %p127, %p128
    %p130 = scmp.ne.s32.totalorder %s122, %s124
    %p131 = scmp.eq.s32.totalorder %s30, 1
    %p132 = por %p130, %p131
    %p133 = scmp.ne.s32.totalorder %s124, %s125
    %p134 = scmp.eq.s32.totalorder %s30, 0
    %p135 = por %p133, %p134
    %p136 = scmp.ne.s32.totalorder %s124, %s125
    %p137 = scmp.eq.s32.totalorder %s31, 1
    %p138 = por %p136, %p137
    %p140 = scmp.ne.s32.totalorder %s125, %s139
    %p141 = scmp.eq.s32.totalorder %s31, 0
    %p142 = por %p140, %p141
    %s144 = sadd.s32 %s143, 1
    %p147 = scmp.eq.s32.totalorder %s25, 1
    %p148 = scmp.ne.s32.totalorder %s143, %s145
    %p149 = scmp.eq.s32.totalorder %s25, 0
    %p150 = por %p148, %p149
    %p151 = scmp.ne.s32.totalorder %s143, %s145
    %p152 = scmp.eq.s32.totalorder %s30, 1
    %p153 = por %p151, %p152
    %p154 = scmp.ne.s32.totalorder %s145, %s146
    %p155 = scmp.eq.s32.totalorder %s30, 0
    %p156 = por %p154, %p155
    %p157 = scmp.ne.s32.totalorder %s145, %s146
    %p158 = scmp.eq.s32.totalorder %s31, 1
    %p159 = por %p157, %p158
    %p161 = scmp.ne.s32.totalorder %s146, %s160
    %p162 = scmp.eq.s32.totalorder %s31, 0
    %p163 = por %p161, %p162
    %s165 = sadd.s32 %s164, 1
    %p168 = scmp.eq.s32.totalorder %s25, 1
    %p169 = scmp.ne.s32.totalorder %s164, %s166
    %p170 = scmp.eq.s32.totalorder %s25, 0
    %p171 = por %p169, %p170
    %p172 = scmp.ne.s32.totalorder %s164, %s166
    %p173 = scmp.eq.s32.totalorder %s30, 1
    %p174 = por %p172, %p173
    %p175 = scmp.ne.s32.totalorder %s166, %s167
    %p176 = scmp.eq.s32.totalorder %s30, 0
    %p177 = por %p175, %p176
    %p178 = scmp.ne.s32.totalorder %s166, %s167
    %p179 = scmp.eq.s32.totalorder %s31, 1
    %p180 = por %p178, %p179
    %p182 = scmp.ne.s32.totalorder %s167, %s181
    %p183 = scmp.eq.s32.totalorder %s31, 0
    %p184 = por %p182, %p183
    %s186 = sadd.s32 %s185, 1
    %p189 = scmp.eq.s32.totalorder %s25, 1
    %p190 = scmp.ne.s32.totalorder %s185, %s187
    %p191 = scmp.eq.s32.totalorder %s25, 0
    %p192 = por %p190, %p191
    %p193 = scmp.ne.s32.totalorder %s185, %s187
    %p194 = scmp.eq.s32.totalorder %s30, 1
    %p195 = por %p193, %p194
    %p196 = scmp.ne.s32.totalorder %s187, %s188
    %p197 = scmp.eq.s32.totalorder %s30, 0
    %p198 = por %p196, %p197
    %p199 = scmp.ne.s32.totalorder %s187, %s188
    %p200 = scmp.eq.s32.totalorder %s31, 1
    %p201 = por %p199, %p200
    %p203 = scmp.ne.s32.totalorder %s188, %s202
    %p204 = scmp.eq.s32.totalorder %s31, 0
    %p205 = por %p203, %p204
    %s207 = sadd.s32 %s206, 1
    %p210 = scmp.eq.s32.totalorder %s25, 1
    %p211 = scmp.ne.s32.totalorder %s206, %s208
    %p212 = scmp.eq.s32.totalorder %s25, 0
    %p213 = por %p211, %p212
    %p214 = scmp.ne.s32.totalorder %s206, %s208
    %p215 = scmp.eq.s32.totalorder %s30, 1
    %p216 = por %p214, %p215
    %p217 = scmp.ne.s32.totalorder %s208, %s209
    %p218 = scmp.eq.s32.totalorder %s30, 0
    %p219 = por %p217, %p218
    %p220 = scmp.ne.s32.totalorder %s208, %s209
    %p221 = scmp.eq.s32.totalorder %s31, 1
    %p222 = por %p220, %p221
    %p224 = scmp.ne.s32.totalorder %s209, %s223
    %p225 = scmp.eq.s32.totalorder %s31, 0
    %p226 = por %p224, %p225
    %s228 = sadd.s32 %s227, 1
    %p231 = scmp.eq.s32.totalorder %s25, 1
    %p232 = scmp.ne.s32.totalorder %s227, %s229
    %p233 = scmp.eq.s32.totalorder %s25, 0
    %p234 = por %p232, %p233
    %p235 = scmp.ne.s32.totalorder %s227, %s229
    %p236 = scmp.eq.s32.totalorder %s30, 1
    %p237 = por %p235, %p236
    %p238 = scmp.ne.s32.totalorder %s229, %s230
    %p239 = scmp.eq.s32.totalorder %s30, 0
    %p240 = por %p238, %p239
    %p241 = scmp.ne.s32.totalorder %s229, %s230
    %p242 = scmp.eq.s32.totalorder %s31, 1
    %p243 = por %p241, %p242
    %p245 = scmp.ne.s32.totalorder %s230, %s244
    %p246 = scmp.eq.s32.totalorder %s31, 0
    %p247 = por %p245, %p246
    %s249 = sadd.s32 %s248, 1
    %p252 = scmp.eq.s32.totalorder %s25, 1
    %p253 = scmp.ne.s32.totalorder %s248, %s250
    %p254 = scmp.eq.s32.totalorder %s25, 0
    %p255 = por %p253, %p254
    %p256 = scmp.ne.s32.totalorder %s248, %s250
    %p257 = scmp.eq.s32.totalorder %s30, 1
    %p258 = por %p256, %p257
    %p259 = scmp.ne.s32.totalorder %s250, %s251
    %p260 = scmp.eq.s32.totalorder %s30, 0
    %p261 = por %p259, %p260
    %p262 = scmp.ne.s32.totalorder %s250, %s251
    %p263 = scmp.eq.s32.totalorder %s31, 1
    %p264 = por %p262, %p263
    %p266 = scmp.ne.s32.totalorder %s251, %s265
    %p267 = scmp.eq.s32.totalorder %s31, 0
    %p268 = por %p266, %p267
    %s270 = sadd.s32 %s269, 1
    %p273 = scmp.eq.s32.totalorder %s25, 1
    %p274 = scmp.ne.s32.totalorder %s269, %s271
    %p275 = scmp.eq.s32.totalorder %s25, 0
    %p276 = por %p274, %p275
    %p277 = scmp.ne.s32.totalorder %s269, %s271
    %p278 = scmp.eq.s32.totalorder %s30, 1
    %p279 = por %p277, %p278
    %p280 = scmp.ne.s32.totalorder %s271, %s272
    %p281 = scmp.eq.s32.totalorder %s30, 0
    %p282 = por %p280, %p281
    %p283 = scmp.ne.s32.totalorder %s271, %s272
    %p284 = scmp.eq.s32.totalorder %s31, 1
    %p285 = por %p283, %p284
    %p287 = scmp.ne.s32.totalorder %s272, %s286
    %p288 = scmp.eq.s32.totalorder %s31, 0
    %p289 = por %p287, %p288
    %s291 = sadd.s32 %s290, 1
    %p294 = scmp.eq.s32.totalorder %s25, 1
    %p295 = scmp.ne.s32.totalorder %s290, %s292
    %p296 = scmp.eq.s32.totalorder %s25, 0
    %p297 = por %p295, %p296
    %p298 = scmp.ne.s32.totalorder %s290, %s292
    %p299 = scmp.eq.s32.totalorder %s30, 1
    %p300 = por %p298, %p299
    %p301 = scmp.ne.s32.totalorder %s292, %s293
    %p302 = scmp.eq.s32.totalorder %s30, 0
    %p303 = por %p301, %p302
    %p304 = scmp.ne.s32.totalorder %s292, %s293
    %p305 = scmp.eq.s32.totalorder %s31, 1
    %p306 = por %p304, %p305
    %p308 = scmp.ne.s32.totalorder %s293, %s307
    %p309 = scmp.eq.s32.totalorder %s31, 0
    %p310 = por %p308, %p309
    %s312 = sadd.s32 %s311, 1
    %p315 = scmp.eq.s32.totalorder %s25, 1
    %p316 = scmp.ne.s32.totalorder %s311, %s313
    %p317 = scmp.eq.s32.totalorder %s25, 0
    %p318 = por %p316, %p317
    %p319 = scmp.ne.s32.totalorder %s311, %s313
    %p320 = scmp.eq.s32.totalorder %s30, 1
    %p321 = por %p319, %p320
    %p322 = scmp.ne.s32.totalorder %s313, %s314
    %p323 = scmp.eq.s32.totalorder %s30, 0
    %p324 = por %p322, %p323
    %p325 = scmp.ne.s32.totalorder %s313, %s314
    %p326 = scmp.eq.s32.totalorder %s31, 1
    %p327 = por %p325, %p326
    %p329 = scmp.ne.s32.totalorder %s314, %s328
    %p330 = scmp.eq.s32.totalorder %s31, 0
    %p331 = por %p329, %p330
    %s333 = sadd.s32 %s332, 1
    %p336 = scmp.eq.s32.totalorder %s25, 1
    %p337 = scmp.ne.s32.totalorder %s332, %s334
    %p338 = scmp.eq.s32.totalorder %s25, 0
    %p339 = por %p337, %p338
    %p340 = scmp.ne.s32.totalorder %s332, %s334
    %p341 = scmp.eq.s32.totalorder %s30, 1
    %p342 = por %p340, %p341
    %p343 = scmp.ne.s32.totalorder %s334, %s335
    %p344 = scmp.eq.s32.totalorder %s30, 0
    %p345 = por %p343, %p344
    %p346 = scmp.ne.s32.totalorder %s334, %s335
    %p347 = scmp.eq.s32.totalorder %s31, 1
    %p348 = por %p346, %p347
    %p350 = scmp.ne.s32.totalorder %s335, %s349
    %p351 = scmp.eq.s32.totalorder %s31, 0
    %p352 = por %p350, %p351
    %s354 = sadd.s32 %s353, 1
    %p357 = scmp.eq.s32.totalorder %s25, 1
    %p358 = scmp.ne.s32.totalorder %s353, %s355
    %p359 = scmp.eq.s32.totalorder %s25, 0
    %p360 = por %p358, %p359
    %p361 = scmp.ne.s32.totalorder %s353, %s355
    %p362 = scmp.eq.s32.totalorder %s30, 1
    %p363 = por %p361, %p362
    %p364 = scmp.ne.s32.totalorder %s355, %s356
    %p365 = scmp.eq.s32.totalorder %s30, 0
    %p366 = por %p364, %p365
    %p367 = scmp.ne.s32.totalorder %s355, %s356
    %p368 = scmp.eq.s32.totalorder %s31, 1
    %p369 = por %p367, %p368
    %p371 = scmp.ne.s32.totalorder %s356, %s370
    %p372 = scmp.eq.s32.totalorder %s31, 0
    %p373 = por %p371, %p372
    %s375 = sadd.s32 %s374, 1
    %p378 = scmp.eq.s32.totalorder %s25, 1
    %p379 = scmp.ne.s32.totalorder %s374, %s376
    %p380 = scmp.eq.s32.totalorder %s25, 0
    %p381 = por %p379, %p380
    %p382 = scmp.ne.s32.totalorder %s374, %s376
    %p383 = scmp.eq.s32.totalorder %s30, 1
    %p384 = por %p382, %p383
    %p385 = scmp.ne.s32.totalorder %s376, %s377
    %p386 = scmp.eq.s32.totalorder %s30, 0
    %p387 = por %p385, %p386
    %p388 = scmp.ne.s32.totalorder %s376, %s377
    %p389 = scmp.eq.s32.totalorder %s31, 1
    %p390 = por %p388, %p389
    %p392 = scmp.ne.s32.totalorder %s377, %s391
    %p393 = scmp.eq.s32.totalorder %s31, 0
    %p394 = por %p392, %p393
    %s396 = sadd.s32 %s395, 1
    %p399 = scmp.eq.s32.totalorder %s25, 1
    %p400 = scmp.ne.s32.totalorder %s395, %s397
    %p401 = scmp.eq.s32.totalorder %s25, 0
    %p402 = por %p400, %p401
    %p403 = scmp.ne.s32.totalorder %s395, %s397
    %p404 = scmp.eq.s32.totalorder %s30, 1
    %p405 = por %p403, %p404
    %p406 = scmp.ne.s32.totalorder %s397, %s398
    %p407 = scmp.eq.s32.totalorder %s30, 0
    %p408 = por %p406, %p407
    %p409 = scmp.ne.s32.totalorder %s397, %s398
    %p410 = scmp.eq.s32.totalorder %s31, 1
    %p411 = por %p409, %p410
    %p413 = scmp.ne.s32.totalorder %s398, %s412
    %p414 = scmp.eq.s32.totalorder %s31, 0
    %p415 = por %p413, %p414
    %s417 = sadd.s32 %s416, 1
    %p420 = scmp.eq.s32.totalorder %s25, 1
    %p421 = scmp.ne.s32.totalorder %s416, %s418
    %p422 = scmp.eq.s32.totalorder %s25, 0
    %p423 = por %p421, %p422
    %p424 = scmp.ne.s32.totalorder %s416, %s418
    %p425 = scmp.eq.s32.totalorder %s30, 1
    %p426 = por %p424, %p425
    %p427 = scmp.ne.s32.totalorder %s418, %s419
    %p428 = scmp.eq.s32.totalorder %s30, 0
    %p429 = por %p427, %p428
    %p430 = scmp.ne.s32.totalorder %s418, %s419
    %p431 = scmp.eq.s32.totalorder %s31, 1
    %p432 = por %p430, %p431
    %p434 = scmp.ne.s32.totalorder %s419, %s433
    %p435 = scmp.eq.s32.totalorder %s31, 0
    %p436 = por %p434, %p435
    %s437 = ssub.s32 %s25, %s32
    %p438 = scmp.eq.s32.totalorder %s437, 0
    %s440 = sadd.s32 %s439, 1
    %s441 = scalar_select %p438, %s439, %s440
    %p444 = pneg %p438
    %p445 = scmp.eq.s32.totalorder %s25, 1
    %p446 = por %p444, %p445
    %p447 = scmp.ne.s32.totalorder %s439, %s442
    %p448 = scmp.eq.s32.totalorder %s25, 0
    %p449 = por %p447, %p448
    %p450 = scmp.ne.s32.totalorder %s439, %s442
    %p451 = scmp.eq.s32.totalorder %s30, 1
    %p452 = por %p450, %p451
    %p453 = scmp.ne.s32.totalorder %s442, %s443
    %p454 = scmp.eq.s32.totalorder %s30, 0
    %p455 = por %p453, %p454
    %p456 = scmp.ne.s32.totalorder %s442, %s443
    %p457 = scmp.eq.s32.totalorder %s31, 1
    %p458 = por %p456, %p457
    %p460 = scmp.ne.s32.totalorder %s443, %s459
    %p461 = scmp.eq.s32.totalorder %s31, 0
    %p462 = por %p460, %p461
    %p463 = scmp.le.s32.totalorder 1, %s25
    %p464 = scmp.lt.s32.totalorder %s25, 3
    %p465 = pnand %p463, %p464
    %p466 = pneg %p465
    // Predicated region
    $region9: #{stf_informer_forward.1} parent=5 // pred_check
      _
    $region10: #{stf_informer_forward.1} parent=5 // pred_check_branch
      %468 = sbr.rel (%p465) target = $region12
    $region11: #{stf_informer_forward.1} parent=5 // pred_region
      %s469 = ssub.s32 %s25, 1
      // Predicated region
      $region13: #{stf_informer_forward.1} parent=11 // pred_check
        %p470 = pneg %p72
      $region14: #{stf_informer_forward.1} parent=11 // pred_check_branch
        %472 = sbr.rel (%p470) target = $region16
      $region15: #{stf_informer_forward.1} parent=11 // pred_region
        _
      $region16: #{stf_informer_forward.1} parent=11 // pred_fallthru
        _
      // Predicated region
      $region17: #{stf_informer_forward.1} parent=11 // pred_check
        %p473 = pneg %p93
      $region18: #{stf_informer_forward.1} parent=11 // pred_check_branch
        %475 = sbr.rel (%p473) target = $region20
      $region19: #{stf_informer_forward.1} parent=11 // pred_region
        _
      $region20: #{stf_informer_forward.1} parent=11 // pred_fallthru
        _
      // Predicated region
      $region21: #{stf_informer_forward.1} parent=11 // pred_check
        %p476 = pneg %p114
      $region22: #{stf_informer_forward.1} parent=11 // pred_check_branch
        %478 = sbr.rel (%p476) target = $region24
      $region23: #{stf_informer_forward.1} parent=11 // pred_region
        _
      $region24: #{stf_informer_forward.1} parent=11 // pred_fallthru
        _
      // Predicated region
      $region25: #{stf_informer_forward.1} parent=11 // pred_check
        %p479 = pneg %p135
      $region26: #{stf_informer_forward.1} parent=11 // pred_check_branch
        %481 = sbr.rel (%p479) target = $region28
      $region27: #{stf_informer_forward.1} parent=11 // pred_region
        _
      $region28: #{stf_informer_forward.1} parent=11 // pred_fallthru
        _
      // Predicated region
      $region29: #{stf_informer_forward.1} parent=11 // pred_check
        %p482 = pneg %p156
      $region30: #{stf_informer_forward.1} parent=11 // pred_check_branch
        %484 = sbr.rel (%p482) target = $region32
      $region31: #{stf_informer_forward.1} parent=11 // pred_region
        _
      $region32: #{stf_informer_forward.1} parent=11 // pred_fallthru
        _
      // Predicated region
      $region33: #{stf_informer_forward.1} parent=11 // pred_check
        %p485 = pneg %p177
      $region34: #{stf_informer_forward.1} parent=11 // pred_check_branch
        %487 = sbr.rel (%p485) target = $region36
      $region35: #{stf_informer_forward.1} parent=11 // pred_region
        _
      $region36: #{stf_informer_forward.1} parent=11 // pred_fallthru
        _
      // Predicated region
      $region37: #{stf_informer_forward.1} parent=11 // pred_check
        %p488 = pneg %p198
      $region38: #{stf_informer_forward.1} parent=11 // pred_check_branch
        %490 = sbr.rel (%p488) target = $region40
      $region39: #{stf_informer_forward.1} parent=11 // pred_region
        _
      $region40: #{stf_informer_forward.1} parent=11 // pred_fallthru
        _
      // Predicated region
      $region41: #{stf_informer_forward.1} parent=11 // pred_check
        %p491 = pneg %p219
      $region42: #{stf_informer_forward.1} parent=11 // pred_check_branch
        %493 = sbr.rel (%p491) target = $region44
      $region43: #{stf_informer_forward.1} parent=11 // pred_region
        _
      $region44: #{stf_informer_forward.1} parent=11 // pred_fallthru
        _
      // Predicated region
      $region45: #{stf_informer_forward.1} parent=11 // pred_check
        %p494 = pneg %p240
      $region46: #{stf_informer_forward.1} parent=11 // pred_check_branch
        %496 = sbr.rel (%p494) target = $region48
      $region47: #{stf_informer_forward.1} parent=11 // pred_region
        _
      $region48: #{stf_informer_forward.1} parent=11 // pred_fallthru
        _
      // Predicated region
      $region49: #{stf_informer_forward.1} parent=11 // pred_check
        %p497 = pneg %p261
      $region50: #{stf_informer_forward.1} parent=11 // pred_check_branch
        %499 = sbr.rel (%p497) target = $region52
      $region51: #{stf_informer_forward.1} parent=11 // pred_region
        _
      $region52: #{stf_informer_forward.1} parent=11 // pred_fallthru
        _
      // Predicated region
      $region53: #{stf_informer_forward.1} parent=11 // pred_check
        %p500 = pneg %p282
      $region54: #{stf_informer_forward.1} parent=11 // pred_check_branch
        %502 = sbr.rel (%p500) target = $region56
      $region55: #{stf_informer_forward.1} parent=11 // pred_region
        _
      $region56: #{stf_informer_forward.1} parent=11 // pred_fallthru
        _
      // Predicated region
      $region57: #{stf_informer_forward.1} parent=11 // pred_check
        %p503 = pneg %p303
      $region58: #{stf_informer_forward.1} parent=11 // pred_check_branch
        %505 = sbr.rel (%p503) target = $region60
      $region59: #{stf_informer_forward.1} parent=11 // pred_region
        _
      $region60: #{stf_informer_forward.1} parent=11 // pred_fallthru
        _
      // Predicated region
      $region61: #{stf_informer_forward.1} parent=11 // pred_check
        %p506 = pneg %p324
      $region62: #{stf_informer_forward.1} parent=11 // pred_check_branch
        %508 = sbr.rel (%p506) target = $region64
      $region63: #{stf_informer_forward.1} parent=11 // pred_region
        _
      $region64: #{stf_informer_forward.1} parent=11 // pred_fallthru
        _
      // Predicated region
      $region65: #{stf_informer_forward.1} parent=11 // pred_check
        %p509 = pneg %p345
      $region66: #{stf_informer_forward.1} parent=11 // pred_check_branch
        %511 = sbr.rel (%p509) target = $region68
      $region67: #{stf_informer_forward.1} parent=11 // pred_region
        _
      $region68: #{stf_informer_forward.1} parent=11 // pred_fallthru
        _
      // Predicated region
      $region69: #{stf_informer_forward.1} parent=11 // pred_check
        %p512 = pneg %p366
      $region70: #{stf_informer_forward.1} parent=11 // pred_check_branch
        %514 = sbr.rel (%p512) target = $region72
      $region71: #{stf_informer_forward.1} parent=11 // pred_region
        _
      $region72: #{stf_informer_forward.1} parent=11 // pred_fallthru
        _
      // Predicated region
      $region73: #{stf_informer_forward.1} parent=11 // pred_check
        %p515 = pneg %p387
      $region74: #{stf_informer_forward.1} parent=11 // pred_check_branch
        %517 = sbr.rel (%p515) target = $region76
      $region75: #{stf_informer_forward.1} parent=11 // pred_region
        _
      $region76: #{stf_informer_forward.1} parent=11 // pred_fallthru
        _
      // Predicated region
      $region77: #{stf_informer_forward.1} parent=11 // pred_check
        %p518 = pneg %p408
      $region78: #{stf_informer_forward.1} parent=11 // pred_check_branch
        %520 = sbr.rel (%p518) target = $region80
      $region79: #{stf_informer_forward.1} parent=11 // pred_region
        _
      $region80: #{stf_informer_forward.1} parent=11 // pred_fallthru
        _
      // Predicated region
      $region81: #{stf_informer_forward.1} parent=11 // pred_check
        %p521 = pneg %p429
      $region82: #{stf_informer_forward.1} parent=11 // pred_check_branch
        %523 = sbr.rel (%p521) target = $region84
      $region83: #{stf_informer_forward.1} parent=11 // pred_region
        _
      $region84: #{stf_informer_forward.1} parent=11 // pred_fallthru
        _
    $region12: #{stf_informer_forward.1} parent=5 // pred_fallthru
      _
    %p524 = scmp.lt.s32.totalorder %s25, 2
    // Predicated region
    $region85: #{stf_informer_forward.1} parent=5 // pred_check
      %p525 = pneg %p524
    $region86: #{stf_informer_forward.1} parent=5 // pred_check_branch
      %527 = sbr.rel (%p525) target = $region88
    $region87: #{stf_informer_forward.1} parent=5 // pred_region
      // Predicated region
      $region89: #{stf_informer_forward.1} parent=87 // pred_check
        %p528 = pneg %p45
      $region90: #{stf_informer_forward.1} parent=87 // pred_check_branch
        %530 = sbr.rel (%p528) target = $region92
      $region91: #{stf_informer_forward.1} parent=87 // pred_region
        %p531 = scmp.lt.s32.totalorder %s25, 1
        %s532 = scalar_select %p531, %s25, 1
        %s533 = smul.addr %s532, 2
        %s534 = smul.addr %s533, 8
        %s535 = scalar_lea.vmem %s0, %s534
      $region92: #{stf_informer_forward.1} parent=87 // pred_fallthru
        _
    $region88: #{stf_informer_forward.1} parent=5 // pred_fallthru
      _
    %p536 = scmp.le.s32.totalorder 1, %s25
    %p537 = scmp.lt.s32.totalorder %s25, 3
    %p538 = pnand %p536, %p537
    %p539 = pneg %p538
    // Predicated region
    $region93: #{stf_informer_forward.1} parent=5 // pred_check
      _
    $region94: #{stf_informer_forward.1} parent=5 // pred_check_branch
      %541 = sbr.rel (%p538) target = $region96
    $region95: #{stf_informer_forward.1} parent=5 // pred_region
      %s542 = ssub.s32 %s25, 1
      %p543 = scmp.lt.s32.totalorder %s30, 1
      %s544 = scalar_select %p543, %s30, 1
      %s545 = smul.addr %s544, 2
      %s546 = smul.addr %s545, 8
      %s547 = scalar_lea.vmem %s0, %s546
      %p548 = pneg %p51
      %p549 = pneg %p48
      %p550 = pneg %p72
      %p551 = pneg %p69
      %p552 = pneg %p93
      %p553 = pneg %p90
      %p554 = pneg %p114
      %p555 = pneg %p111
      %p556 = pneg %p135
      %p557 = pneg %p132
      %p558 = pneg %p156
      %p559 = pneg %p153
      %p560 = pneg %p177
      %p561 = pneg %p174
      %p562 = pneg %p198
      %p563 = pneg %p195
      %p564 = pneg %p219
      %p565 = pneg %p216
      %p566 = pneg %p240
      %p567 = pneg %p237
      %p568 = pneg %p261
      %p569 = pneg %p258
      %p570 = pneg %p282
      %p571 = pneg %p279
      %p572 = pneg %p303
      %p573 = pneg %p300
      %p574 = pneg %p324
      %p575 = pneg %p321
      %p576 = pneg %p345
      %p577 = pneg %p342
      %p578 = pneg %p366
      %p579 = pneg %p363
      %p580 = pneg %p387
      %p581 = pneg %p384
      %p582 = pneg %p408
      %p583 = pneg %p405
      %p584 = pneg %p429
      %p585 = pneg %p426
      %p586 = pneg %p455
      %p587 = pneg %p452
      %p588 = scmp.lt.s32.totalorder %s30, 1
      %s589 = scalar_select %p588, %s30, 1
      %s590 = smul.addr %s589, 2
      %s591 = smul.addr %s590, 8
      %s592 = scalar_lea.vmem %s19, %s591
      %p593 = scmp.lt.s32.totalorder %s30, 1
      %s594 = scalar_select %p593, %s30, 1
      %s595 = smul.addr %s594, 2
      %s596 = smul.addr %s595, 8
      %s597 = scalar_lea.vmem %s0, %s596
      %p598 = scmp.lt.s32.totalorder %s30, 1
      %s599 = scalar_select %p598, %s30, 1
      %s600 = smul.addr %s599, 2
      %s601 = smul.addr %s600, 8
      %s602 = scalar_lea.vmem %s19, %s601
      %v604 = vld [vmem:[%s597] sm:$0xff]
      %v605 = vld [vmem:[%s597 + $0x8] sm:$0xff]
      %v606 = vld [vmem:[%s1] sm:$0xff]
      %v607 = vld [vmem:[%s1 + $0x8] sm:$0xff]
      %v608 = vpack.c.bf16 %v605, %v604
      %v609 = vld [vmem:[%s2] sm:$0xf]
      %vm610 = vcmask 64512
      %v612 = vsel %vm610, %v608, 0
      %vm614 = vcmask 1043456
      %v616 = vsel %vm614, %v609, 0
      %618 = vmatprep.subr.bf16.mxu0 0
      %619 = vmatpush1.bf16.msra.mxu0 0
      %620 = vmatprep.subr.bf16.mxu0 0
      %621 = vmatpush1.bf16.msra.mxu0 0
      %622 = vmatprep.subr.bf16.mxu0 0
      %623 = vmatpush1.bf16.msra.mxu0 0
      %624 = vmatprep.subr.bf16.mxu0 0
      %625 = vmatpush1.bf16.msra.mxu0 0
      %626 = vmatprep.subr.bf16.mxu0 0
      %627 = vmatpush1.bf16.msra.mxu0 0
      %628 = vmatprep.subr.bf16.mxu0 0
      %629 = vmatpush1.bf16.msra.mxu0 0
      %630 = vmatprep.subr.bf16.mxu0 0
      %631 = vmatpush1.bf16.msra.mxu0 0
      %632 = vmatprep.subr.bf16.mxu0 0
      %633 = vmatpush1.bf16.msra.mxu0 %v616
      %634 = vmatprep.subr.bf16.mxu0 0
      %635 = vmatpush2.bf16.msra.mxu0 0
      %636 = vmatprep.subr.bf16.mxu0 0
      %637 = vmatpush2.bf16.msra.mxu0 0
      %638 = vmatprep.subr.bf16.mxu0 0
      %639 = vmatpush2.bf16.msra.mxu0 0
      %640 = vmatprep.subr.bf16.mxu0 0
      %641 = vmatpush2.bf16.msra.mxu0 0
      %642 = vmatprep.subr.bf16.mxu0 0
      %643 = vmatpush2.bf16.msra.mxu0 0
      %644 = vmatprep.subr.bf16.mxu0 0
      %645 = vmatpush2.bf16.msra.mxu0 0
      %646 = vmatprep.subr.bf16.mxu0 0
      %647 = vmatpush2.bf16.msra.mxu0 0
      %648 = vmatprep.subr.bf16.mxu0 0
      %649 = vmatpush2.bf16.msra.mxu0 0
      %650 = vmatprep.mubr.bf16.mxu0 0
      %651 = vmatmul.mubr.bf16.gmra.mxu0 %v612
      %v652 = vpop.f32.mrf.mxu0
      %v653 = vadd.f32 0.0, %v652
      %v654 = vpop.f32.mrf.mxu0
      %v655 = vpop.f32.mrf.mxu0
      %v656 = vadd.f32 0.0, %v655
      %v657 = vpop.f32.mrf.mxu0
      %658 = vdwg.mxu0
      %v659 = vld [vmem:[%s3] sm:$0x1]
      %v661 = vlaneseq
      %v662 = vshrl.u32 %v661, 7
      %v663 = vsub.s32 0, %v662
      %v664 = vrot.slane %v659, %v663
      %v666 = vmul.f32 %v653, %v664
      %v667 = vmul.f32 %v656, %v664
      %vm668 = vcmask 261120
      %v669 = vsel %vm668, %v666, 0.0
      %670 = vadd.xlane.f32.xlu0 %v669
      %v671 = vpop.xlane.xlu0 %670
      %v672 = vsel %vm668, %v667, 0.0
      %673 = vadd.xlane.f32.xlu0 %v672
      %v674 = vpop.xlane.xlu0 %673
      %v675 = vld [vmem:[%s4] sm:$0x1]
      %v677 = vsel %vm668, %v675, 0
      %v680 = vsel %vm668, %v653, 0
      %v683 = vsel %vm668, %v656, 0
      %685 = vmatprep.subr.mxu0 0.0
      %686 = vmatpush1.xpose.msra.mxu0 0.0
      %687 = vmatprep.subr.mxu0 0.0
      %688 = vmatpush1.xpose.msra.mxu0 0.0
      %689 = vmatprep.subr.mxu0 0.0
      %690 = vmatpush1.xpose.msra.mxu0 0.0
      %691 = vmatprep.subr.mxu0 0.0
      %692 = vmatpush1.xpose.msra.mxu0 0.0
      %693 = vmatprep.subr.mxu0 0.0
      %694 = vmatpush1.xpose.msra.mxu0 0.0
      %695 = vmatprep.subr.mxu0 0.0
      %696 = vmatpush1.xpose.msra.mxu0 0.0
      %697 = vmatprep.subr.mxu0 0.0
      %698 = vmatpush1.xpose.msra.mxu0 0.0
      %699 = vmatprep.subr.mxu0 0.0
      %700 = vmatpush1.xpose.msra.mxu0 0.0
      %701 = vmatprep.subr.mxu0 0.0
      %702 = vmatpush1.xpose.msra.mxu0 0.0
      %703 = vmatprep.subr.mxu0 0.0
      %704 = vmatpush1.xpose.msra.mxu0 0.0
      %705 = vmatprep.subr.mxu0 0.0
      %706 = vmatpush1.xpose.msra.mxu0 0.0
      %707 = vmatprep.subr.mxu0 0.0
      %708 = vmatpush1.xpose.msra.mxu0 0.0
      %709 = vmatprep.subr.mxu0 0.0
      %710 = vmatpush1.xpose.msra.mxu0 0.0
      %711 = vmatprep.subr.mxu0 0.0
      %712 = vmatpush1.xpose.msra.mxu0 0.0
      %713 = vmatprep.subr.mxu0 0.0
      %714 = vmatpush1.xpose.msra.mxu0 %v683
      %715 = vmatprep.subr.mxu0 0.0
      %716 = vmatpush1.xpose.msra.mxu0 %v680
      %717 = vmatprep.subr.mxu0 0.0
      %718 = vmatpush2.xpose.msra.mxu0 0.0
      %719 = vmatprep.subr.mxu0 0.0
      %720 = vmatpush2.xpose.msra.mxu0 0.0
      %721 = vmatprep.subr.mxu0 0.0
      %722 = vmatpush2.xpose.msra.mxu0 0.0
      %723 = vmatprep.subr.mxu0 0.0
      %724 = vmatpush2.xpose.msra.mxu0 0.0
      %725 = vmatprep.subr.mxu0 0.0
      %726 = vmatpush2.xpose.msra.mxu0 0.0
      %727 = vmatprep.subr.mxu0 0.0
      %728 = vmatpush2.xpose.msra.mxu0 0.0
      %729 = vmatprep.subr.mxu0 0.0
      %730 = vmatpush2.xpose.msra.mxu0 0.0
      %731 = vmatprep.subr.mxu0 0.0
      %732 = vmatpush2.xpose.msra.mxu0 0.0
      %733 = vmatprep.subr.mxu0 0.0
      %734 = vmatpush2.xpose.msra.mxu0 0.0
      %735 = vmatprep.subr.mxu0 0.0
      %736 = vmatpush2.xpose.msra.mxu0 0.0
      %737 = vmatprep.subr.mxu0 0.0
      %738 = vmatpush2.xpose.msra.mxu0 0.0
      %739 = vmatprep.subr.mxu0 0.0
      %740 = vmatpush2.xpose.msra.mxu0 0.0
      %741 = vmatprep.subr.mxu0 0.0
      %742 = vmatpush2.xpose.msra.mxu0 0.0
      %743 = vmatprep.subr.mxu0 0.0
      %744 = vmatpush2.xpose.msra.mxu0 0.0
      %745 = vmatprep.subr.mxu0 0.0
      %746 = vmatpush2.xpose.msra.mxu0 0.0
      %747 = vmatprep.subr.mxu0 0.0
      %748 = vmatpush2.xpose.msra.mxu0 0.0
      %749 = vmatprep.mubr.f32.mxu0 0.0
      %750 = vmatmul.mubr.f32.gmra.mxu0 %v677
      %v751 = vpop.f32.mrf.mxu0
      %v752 = vadd.f32 0.0, %v751
      %v753 = vpop.f32.mrf.mxu0
      %754 = vdwg.mxu0
      %v755 = vlaneseq
      %v756 = vshrl.u32 %v755, 7
      %v757 = vsub.s32 0, %v756
      %v758 = vrot.slane %v752, %v757
      %v759 = vadd.f32 %v671, %v758
      %v760 = vadd.f32 %v674, %v758
      %vm761 = vcmp.gt.f32.partialorder %v759, 0.0
      %vm762 = vcmp.gt.f32.partialorder %v760, 0.0
      %v763 = vmul.f32 %v759, 0.2
      %v764 = vmul.f32 %v760, 0.2
      %v765 = vsel %vm761, %v759, %v763
      %v766 = vsel %vm762, %v760, %v764
      %v767 = vadd.f32 %v765, %v606
      %v768 = vadd.f32 %v766, %v607
      %vm769 = vcmask 130048
      %v770 = vsel %vm769, %v767, -inf
      %771 = vmax.xlane.f32.xlu0 %v770
      %v772 = vpop.xlane.xlu0 %771
      %v773 = vsel %vm769, %v768, -inf
      %774 = vmax.xlane.f32.xlu0 %v773
      %v775 = vpop.xlane.xlu0 %774
      %v776 = vsub.f32 %v767, %v772
      %v777 = vsub.f32 %v768, %v775
      %v778 = vmul.f32 %v776, 1.442695
      %v779 = vpow.pop %v778
      %v780 = vmul.f32 %v777, 1.442695
      %v781 = vpow.pop %v780
      %v782 = vsel %vm769, %v779, 0.0
      %783 = vadd.xlane.f32.xlu0 %v782
      %v784 = vpop.xlane.xlu0 %783
      %v785 = vsel %vm769, %v781, 0.0
      %786 = vadd.xlane.f32.xlu0 %v785
      %v787 = vpop.xlane.xlu0 %786
      %v788 = vrcp.pop %v784
      %v789 = vrcp.pop %v787
      %v790 = vmul.f32 %v779, %v788
      %v791 = vmul.f32 %v781, %v789
      %v792 = vpack.c.bf16 %v791, %v790
      %v793 = vpack.c.bf16 %v656, %v653
      %v795 = vsel %vm769, %v792, 0
      %797 = vmatprep.subr.bf16.mxu0 0
      %798 = vmatpush1.bf16.msra.mxu0 0
      %799 = vmatprep.subr.bf16.mxu0 0
      %800 = vmatpush1.bf16.msra.mxu0 0
      %801 = vmatprep.subr.bf16.mxu0 0
      %802 = vmatpush1.bf16.msra.mxu0 0
      %803 = vmatprep.subr.bf16.mxu0 0
      %804 = vmatpush1.bf16.msra.mxu0 0
      %805 = vmatprep.subr.bf16.mxu0 0
      %806 = vmatpush1.bf16.msra.mxu0 0
      %807 = vmatprep.subr.bf16.mxu0 0
      %808 = vmatpush1.bf16.msra.mxu0 0
      %809 = vmatprep.subr.bf16.mxu0 0
      %810 = vmatpush1.bf16.msra.mxu0 0
      %811 = vmatprep.subr.bf16.mxu0 0
      %812 = vmatpush1.bf16.msra.mxu0 %v793
      %813 = vmatprep.subr.bf16.mxu0 0
      %814 = vmatpush2.bf16.msra.mxu0 0
      %815 = vmatprep.subr.bf16.mxu0 0
      %816 = vmatpush2.bf16.msra.mxu0 0
      %817 = vmatprep.subr.bf16.mxu0 0
      %818 = vmatpush2.bf16.msra.mxu0 0
      %819 = vmatprep.subr.bf16.mxu0 0
      %820 = vmatpush2.bf16.msra.mxu0 0
      %821 = vmatprep.subr.bf16.mxu0 0
      %822 = vmatpush2.bf16.msra.mxu0 0
      %823 = vmatprep.subr.bf16.mxu0 0
      %824 = vmatpush2.bf16.msra.mxu0 0
      %825 = vmatprep.subr.bf16.mxu0 0
      %826 = vmatpush2.bf16.msra.mxu0 0
      %827 = vmatprep.subr.bf16.mxu0 0
      %828 = vmatpush2.bf16.msra.mxu0 0
      %829 = vmatprep.mubr.bf16.mxu0 0
      %830 = vmatmul.mubr.bf16.gmra.mxu0 %v795
      %v831 = vpop.f32.mrf.mxu0
      %v832 = vadd.f32 0.0, %v831
      %v833 = vpop.f32.mrf.mxu0
      %v834 = vpop.f32.mrf.mxu0
      %v835 = vadd.f32 0.0, %v834
      %v836 = vpop.f32.mrf.mxu0
      %837 = vdwg.mxu0
      %vm838 = vcmp.gt.f32.partialorder %v832, 0.0
      %vm839 = vcmp.gt.f32.partialorder %v835, 0.0
      %v840 = vmul.f32 %v832, 1.442695
      %v841 = vpow.pop %v840
      %v842 = vmul.f32 %v835, 1.442695
      %v843 = vpow.pop %v842
      %v844 = vsub.f32 %v841, 1.0
      %v845 = vsub.f32 %v843, 1.0
      %v846 = vsel %vm838, %v832, %v844
      %v847 = vsel %vm839, %v835, %v845
      %v848 = vpack.c.bf16 %v847, %v846
      %v849 = vld [vmem:[%s5] sm:$0xf]
      %v850 = vld [vmem:[%s5 + $0x4] sm:$0xf]
      %v851 = vld [vmem:[%s5 + $0x8] sm:$0xf]
      %v852 = vld [vmem:[%s5 + $0xc] sm:$0xf]
      %v857 = vunpack.c.l.b16 %v849
      %v858 = vunpack.c.l.b16 %v850
      %v859 = vunpack.c.l.b16 %v851
      %v860 = vunpack.c.l.b16 %v852
      %v861 = vpack.c.b16 %v858, %v857
      %v862 = vpack.c.b16 %v860, %v859
      %v866 = vsel %vm668, %v848, 0
      %868 = vmatprep.subr.bf16.mxu0 0
      %869 = vmatpush1.bf16.msra.mxu0 0
      %870 = vmatprep.subr.bf16.mxu0 0
      %871 = vmatpush1.bf16.msra.mxu0 0
      %872 = vmatprep.subr.bf16.mxu0 0
      %873 = vmatpush1.bf16.msra.mxu0 0
      %874 = vmatprep.subr.bf16.mxu0 0
      %875 = vmatpush1.bf16.msra.mxu0 0
      %876 = vmatprep.subr.bf16.mxu0 0
      %877 = vmatpush1.bf16.msra.mxu0 0
      %878 = vmatprep.subr.bf16.mxu0 0
      %879 = vmatpush1.bf16.msra.mxu0 0
      %880 = vmatprep.subr.bf16.mxu0 0
      %881 = vmatpush1.bf16.msra.mxu0 %v862
      %882 = vmatprep.subr.bf16.mxu0 0
      %883 = vmatpush1.bf16.msra.mxu0 %v861
      %884 = vmatprep.subr.bf16.mxu0 0
      %885 = vmatpush2.bf16.msra.mxu0 0
      %886 = vmatprep.subr.bf16.mxu0 0
      %887 = vmatpush2.bf16.msra.mxu0 0
      %888 = vmatprep.subr.bf16.mxu0 0
      %889 = vmatpush2.bf16.msra.mxu0 0
      %890 = vmatprep.subr.bf16.mxu0 0
      %891 = vmatpush2.bf16.msra.mxu0 0
      %892 = vmatprep.subr.bf16.mxu0 0
      %893 = vmatpush2.bf16.msra.mxu0 0
      %894 = vmatprep.subr.bf16.mxu0 0
      %895 = vmatpush2.bf16.msra.mxu0 0
      %896 = vmatprep.subr.bf16.mxu0 0
      %897 = vmatpush2.bf16.msra.mxu0 0
      %898 = vmatprep.subr.bf16.mxu0 0
      %899 = vmatpush2.bf16.msra.mxu0 0
      %900 = vmatprep.mubr.bf16.mxu0 0
      %901 = vmatmul.mubr.bf16.gmra.mxu0 %v866
      %v902 = vpop.f32.mrf.mxu0
      %v903 = vadd.f32 0.0, %v902
      %v904 = vpop.f32.mrf.mxu0
      %v905 = vpop.f32.mrf.mxu0
      %v906 = vadd.f32 0.0, %v905
      %v907 = vpop.f32.mrf.mxu0
      %908 = vdwg.mxu0
      %v909 = vld [vmem:[%s6] sm:$0x1]
      %v911 = vlaneseq
      %v912 = vshrl.u32 %v911, 7
      %v913 = vsub.s32 0, %v912
      %v914 = vrot.slane %v909, %v913
      %v916 = vmul.f32 %v903, %v914
      %v917 = vmul.f32 %v906, %v914
      %v918 = vsel %vm668, %v916, 0.0
      %919 = vadd.xlane.f32.xlu0 %v918
      %v920 = vpop.xlane.xlu0 %919
      %v921 = vsel %vm668, %v917, 0.0
      %922 = vadd.xlane.f32.xlu0 %v921
      %v923 = vpop.xlane.xlu0 %922
      %v924 = vld [vmem:[%s7] sm:$0x1]
      %v926 = vsel %vm668, %v924, 0
      %v929 = vsel %vm668, %v903, 0
      %v932 = vsel %vm668, %v906, 0
      %934 = vmatprep.subr.mxu0 0.0
      %935 = vmatpush1.xpose.msra.mxu0 0.0
      %936 = vmatprep.subr.mxu0 0.0
      %937 = vmatpush1.xpose.msra.mxu0 0.0
      %938 = vmatprep.subr.mxu0 0.0
      %939 = vmatpush1.xpose.msra.mxu0 0.0
      %940 = vmatprep.subr.mxu0 0.0
      %941 = vmatpush1.xpose.msra.mxu0 0.0
      %942 = vmatprep.subr.mxu0 0.0
      %943 = vmatpush1.xpose.msra.mxu0 0.0
      %944 = vmatprep.subr.mxu0 0.0
      %945 = vmatpush1.xpose.msra.mxu0 0.0
      %946 = vmatprep.subr.mxu0 0.0
      %947 = vmatpush1.xpose.msra.mxu0 0.0
      %948 = vmatprep.subr.mxu0 0.0
      %949 = vmatpush1.xpose.msra.mxu0 0.0
      %950 = vmatprep.subr.mxu0 0.0
      %951 = vmatpush1.xpose.msra.mxu0 0.0
      %952 = vmatprep.subr.mxu0 0.0
      %953 = vmatpush1.xpose.msra.mxu0 0.0
      %954 = vmatprep.subr.mxu0 0.0
      %955 = vmatpush1.xpose.msra.mxu0 0.0
      %956 = vmatprep.subr.mxu0 0.0
      %957 = vmatpush1.xpose.msra.mxu0 0.0
      %958 = vmatprep.subr.mxu0 0.0
      %959 = vmatpush1.xpose.msra.mxu0 0.0
      %960 = vmatprep.subr.mxu0 0.0
      %961 = vmatpush1.xpose.msra.mxu0 0.0
      %962 = vmatprep.subr.mxu0 0.0
      %963 = vmatpush1.xpose.msra.mxu0 %v932
      %964 = vmatprep.subr.mxu0 0.0
      %965 = vmatpush1.xpose.msra.mxu0 %v929
      %966 = vmatprep.subr.mxu0 0.0
      %967 = vmatpush2.xpose.msra.mxu0 0.0
      %968 = vmatprep.subr.mxu0 0.0
      %969 = vmatpush2.xpose.msra.mxu0 0.0
      %970 = vmatprep.subr.mxu0 0.0
      %971 = vmatpush2.xpose.msra.mxu0 0.0
      %972 = vmatprep.subr.mxu0 0.0
      %973 = vmatpush2.xpose.msra.mxu0 0.0
      %974 = vmatprep.subr.mxu0 0.0
      %975 = vmatpush2.xpose.msra.mxu0 0.0
      %976 = vmatprep.subr.mxu0 0.0
      %977 = vmatpush2.xpose.msra.mxu0 0.0
      %978 = vmatprep.subr.mxu0 0.0
      %979 = vmatpush2.xpose.msra.mxu0 0.0
      %980 = vmatprep.subr.mxu0 0.0
      %981 = vmatpush2.xpose.msra.mxu0 0.0
      %982 = vmatprep.subr.mxu0 0.0
      %983 = vmatpush2.xpose.msra.mxu0 0.0
      %984 = vmatprep.subr.mxu0 0.0
      %985 = vmatpush2.xpose.msra.mxu0 0.0
      %986 = vmatprep.subr.mxu0 0.0
      %987 = vmatpush2.xpose.msra.mxu0 0.0
      %988 = vmatprep.subr.mxu0 0.0
      %989 = vmatpush2.xpose.msra.mxu0 0.0
      %990 = vmatprep.subr.mxu0 0.0
      %991 = vmatpush2.xpose.msra.mxu0 0.0
      %992 = vmatprep.subr.mxu0 0.0
      %993 = vmatpush2.xpose.msra.mxu0 0.0
      %994 = vmatprep.subr.mxu0 0.0
      %995 = vmatpush2.xpose.msra.mxu0 0.0
      %996 = vmatprep.subr.mxu0 0.0
      %997 = vmatpush2.xpose.msra.mxu0 0.0
      %998 = vmatprep.mubr.f32.mxu0 0.0
      %999 = vmatmul.mubr.f32.gmra.mxu0 %v926
      %v1000 = vpop.f32.mrf.mxu0
      %v1001 = vadd.f32 0.0, %v1000
      %v1002 = vpop.f32.mrf.mxu0
      %1003 = vdwg.mxu0
      %v1004 = vlaneseq
      %v1005 = vshrl.u32 %v1004, 7
      %v1006 = vsub.s32 0, %v1005
      %v1007 = vrot.slane %v1001, %v1006
      %v1008 = vadd.f32 %v920, %v1007
      %v1009 = vadd.f32 %v923, %v1007
      %vm1010 = vcmp.gt.f32.partialorder %v1008, 0.0
      %vm1011 = vcmp.gt.f32.partialorder %v1009, 0.0
      %v1012 = vmul.f32 %v1008, 0.2
      %v1013 = vmul.f32 %v1009, 0.2
      %v1014 = vsel %vm1010, %v1008, %v1012
      %v1015 = vsel %vm1011, %v1009, %v1013
      %v1016 = vadd.f32 %v1014, %v606
      %v1017 = vadd.f32 %v1015, %v607
      %v1018 = vsel %vm769, %v1016, -inf
      %1019 = vmax.xlane.f32.xlu0 %v1018
      %v1020 = vpop.xlane.xlu0 %1019
      %v1021 = vsel %vm769, %v1017, -inf
      %1022 = vmax.xlane.f32.xlu0 %v1021
      %v1023 = vpop.xlane.xlu0 %1022
      %v1024 = vsub.f32 %v1016, %v1020
      %v1025 = vsub.f32 %v1017, %v1023
      %v1026 = vmul.f32 %v1024, 1.442695
      %v1027 = vpow.pop %v1026
      %v1028 = vmul.f32 %v1025, 1.442695
      %v1029 = vpow.pop %v1028
      %v1030 = vsel %vm769, %v1027, 0.0
      %1031 = vadd.xlane.f32.xlu0 %v1030
      %v1032 = vpop.xlane.xlu0 %1031
      %v1033 = vsel %vm769, %v1029, 0.0
      %1034 = vadd.xlane.f32.xlu0 %v1033
      %v1035 = vpop.xlane.xlu0 %1034
      %v1036 = vrcp.pop %v1032
      %v1037 = vrcp.pop %v1035
      %v1038 = vmul.f32 %v1027, %v1036
      %v1039 = vmul.f32 %v1029, %v1037
      %v1040 = vpack.c.bf16 %v1039, %v1038
      %v1041 = vpack.c.bf16 %v906, %v903
      %v1043 = vsel %vm769, %v1040, 0
      %1045 = vmatprep.subr.bf16.mxu0 0
      %1046 = vmatpush1.bf16.msra.mxu0 0
      %1047 = vmatprep.subr.bf16.mxu0 0
      %1048 = vmatpush1.bf16.msra.mxu0 0
      %1049 = vmatprep.subr.bf16.mxu0 0
      %1050 = vmatpush1.bf16.msra.mxu0 0
      %1051 = vmatprep.subr.bf16.mxu0 0
      %1052 = vmatpush1.bf16.msra.mxu0 0
      %1053 = vmatprep.subr.bf16.mxu0 0
      %1054 = vmatpush1.bf16.msra.mxu0 0
      %1055 = vmatprep.subr.bf16.mxu0 0
      %1056 = vmatpush1.bf16.msra.mxu0 0
      %1057 = vmatprep.subr.bf16.mxu0 0
      %1058 = vmatpush1.bf16.msra.mxu0 0
      %1059 = vmatprep.subr.bf16.mxu0 0
      %1060 = vmatpush1.bf16.msra.mxu0 %v1041
      %1061 = vmatprep.subr.bf16.mxu0 0
      %1062 = vmatpush2.bf16.msra.mxu0 0
      %1063 = vmatprep.subr.bf16.mxu0 0
      %1064 = vmatpush2.bf16.msra.mxu0 0
      %1065 = vmatprep.subr.bf16.mxu0 0
      %1066 = vmatpush2.bf16.msra.mxu0 0
      %1067 = vmatprep.subr.bf16.mxu0 0
      %1068 = vmatpush2.bf16.msra.mxu0 0
      %1069 = vmatprep.subr.bf16.mxu0 0
      %1070 = vmatpush2.bf16.msra.mxu0 0
      %1071 = vmatprep.subr.bf16.mxu0 0
      %1072 = vmatpush2.bf16.msra.mxu0 0
      %1073 = vmatprep.subr.bf16.mxu0 0
      %1074 = vmatpush2.bf16.msra.mxu0 0
      %1075 = vmatprep.subr.bf16.mxu0 0
      %1076 = vmatpush2.bf16.msra.mxu0 0
      %1077 = vmatprep.mubr.bf16.mxu0 0
      %1078 = vmatmul.mubr.bf16.gmra.mxu0 %v1043
      %v1079 = vpop.f32.mrf.mxu0
      %v1080 = vadd.f32 0.0, %v1079
      %v1081 = vpop.f32.mrf.mxu0
      %v1082 = vpop.f32.mrf.mxu0
      %v1083 = vadd.f32 0.0, %v1082
      %v1084 = vpop.f32.mrf.mxu0
      %1085 = vdwg.mxu0
      %vm1086 = vcmp.gt.f32.partialorder %v1080, 0.0
      %vm1087 = vcmp.gt.f32.partialorder %v1083, 0.0
      %v1088 = vmul.f32 %v1080, 1.442695
      %v1089 = vpow.pop %v1088
      %v1090 = vmul.f32 %v1083, 1.442695
      %v1091 = vpow.pop %v1090
      %v1092 = vsub.f32 %v1089, 1.0
      %v1093 = vsub.f32 %v1091, 1.0
      %v1094 = vsel %vm1086, %v1080, %v1092
      %v1095 = vsel %vm1087, %v1083, %v1093
      %v1096 = vpack.c.bf16 %v1095, %v1094
      %v1097 = vld [vmem:[%s8] sm:$0xf]
      %v1098 = vld [vmem:[%s8 + $0x4] sm:$0xf]
      %v1099 = vld [vmem:[%s8 + $0x8] sm:$0xf]
      %v1100 = vld [vmem:[%s8 + $0xc] sm:$0xf]
      %v1105 = vunpack.c.l.b16 %v1097
      %v1106 = vunpack.c.l.b16 %v1098
      %v1107 = vunpack.c.l.b16 %v1099
      %v1108 = vunpack.c.l.b16 %v1100
      %v1109 = vpack.c.b16 %v1106, %v1105
      %v1110 = vpack.c.b16 %v1108, %v1107
      %v1114 = vsel %vm668, %v1096, 0
      %1116 = vmatprep.subr.bf16.mxu0 0
      %1117 = vmatpush1.bf16.msra.mxu0 0
      %1118 = vmatprep.subr.bf16.mxu0 0
      %1119 = vmatpush1.bf16.msra.mxu0 0
      %1120 = vmatprep.subr.bf16.mxu0 0
      %1121 = vmatpush1.bf16.msra.mxu0 0
      %1122 = vmatprep.subr.bf16.mxu0 0
      %1123 = vmatpush1.bf16.msra.mxu0 0
      %1124 = vmatprep.subr.bf16.mxu0 0
      %1125 = vmatpush1.bf16.msra.mxu0 0
      %1126 = vmatprep.subr.bf16.mxu0 0
      %1127 = vmatpush1.bf16.msra.mxu0 0
      %1128 = vmatprep.subr.bf16.mxu0 0
      %1129 = vmatpush1.bf16.msra.mxu0 %v1110
      %1130 = vmatprep.subr.bf16.mxu0 0
      %1131 = vmatpush1.bf16.msra.mxu0 %v1109
      %1132 = vmatprep.subr.bf16.mxu0 0
      %1133 = vmatpush2.bf16.msra.mxu0 0
      %1134 = vmatprep.subr.bf16.mxu0 0
      %1135 = vmatpush2.bf16.msra.mxu0 0
      %1136 = vmatprep.subr.bf16.mxu0 0
      %1137 = vmatpush2.bf16.msra.mxu0 0
      %1138 = vmatprep.subr.bf16.mxu0 0
      %1139 = vmatpush2.bf16.msra.mxu0 0
      %1140 = vmatprep.subr.bf16.mxu0 0
      %1141 = vmatpush2.bf16.msra.mxu0 0
      %1142 = vmatprep.subr.bf16.mxu0 0
      %1143 = vmatpush2.bf16.msra.mxu0 0
      %1144 = vmatprep.subr.bf16.mxu0 0
      %1145 = vmatpush2.bf16.msra.mxu0 0
      %1146 = vmatprep.subr.bf16.mxu0 0
      %1147 = vmatpush2.bf16.msra.mxu0 0
      %1148 = vmatprep.mubr.bf16.mxu0 0
      %1149 = vmatmul.mubr.bf16.gmra.mxu0 %v1114
      %v1150 = vpop.f32.mrf.mxu0
      %v1151 = vadd.f32 0.0, %v1150
      %v1152 = vpop.f32.mrf.mxu0
      %v1153 = vpop.f32.mrf.mxu0
      %v1154 = vadd.f32 0.0, %v1153
      %v1155 = vpop.f32.mrf.mxu0
      %1156 = vdwg.mxu0
      %s1157 = scalar_lea.vmem %s8, 16
      %v1158 = vld [vmem:[%s1157] sm:$0xf]
      %v1159 = vld [vmem:[%s1157 + $0x4] sm:$0xf]
      %v1160 = vld [vmem:[%s1157 + $0x8] sm:$0xf]
      %v1161 = vld [vmem:[%s1157 + $0xc] sm:$0xf]
      %v1166 = vunpack.c.l.b16 %v1158
      %v1167 = vunpack.c.l.b16 %v1159
      %v1168 = vunpack.c.l.b16 %v1160
      %v1169 = vunpack.c.l.b16 %v1161
      %v1170 = vpack.c.b16 %v1167, %v1166
      %v1171 = vpack.c.b16 %v1169, %v1168
      %1174 = vmatprep.subr.bf16.mxu0 0
      %1175 = vmatpush1.bf16.msra.mxu0 0
      %1176 = vmatprep.subr.bf16.mxu0 0
      %1177 = vmatpush1.bf16.msra.mxu0 0
      %1178 = vmatprep.subr.bf16.mxu0 0
      %1179 = vmatpush1.bf16.msra.mxu0 0
      %1180 = vmatprep.subr.bf16.mxu0 0
      %1181 = vmatpush1.bf16.msra.mxu0 0
      %1182 = vmatprep.subr.bf16.mxu0 0
      %1183 = vmatpush1.bf16.msra.mxu0 0
      %1184 = vmatprep.subr.bf16.mxu0 0
      %1185 = vmatpush1.bf16.msra.mxu0 0
      %1186 = vmatprep.subr.bf16.mxu0 0
      %1187 = vmatpush1.bf16.msra.mxu0 %v1171
      %1188 = vmatprep.subr.bf16.mxu0 0
      %1189 = vmatpush1.bf16.msra.mxu0 %v1170
      %1190 = vmatprep.subr.bf16.mxu0 0
      %1191 = vmatpush2.bf16.msra.mxu0 0
      %1192 = vmatprep.subr.bf16.mxu0 0
      %1193 = vmatpush2.bf16.msra.mxu0 0
      %1194 = vmatprep.subr.bf16.mxu0 0
      %1195 = vmatpush2.bf16.msra.mxu0 0
      %1196 = vmatprep.subr.bf16.mxu0 0
      %1197 = vmatpush2.bf16.msra.mxu0 0
      %1198 = vmatprep.subr.bf16.mxu0 0
      %1199 = vmatpush2.bf16.msra.mxu0 0
      %1200 = vmatprep.subr.bf16.mxu0 0
      %1201 = vmatpush2.bf16.msra.mxu0 0
      %1202 = vmatprep.subr.bf16.mxu0 0
      %1203 = vmatpush2.bf16.msra.mxu0 0
      %1204 = vmatprep.subr.bf16.mxu0 0
      %1205 = vmatpush2.bf16.msra.mxu0 0
      %1206 = vmatprep.mubr.bf16.mxu0 0
      %1207 = vmatmul.mubr.bf16.gmra.mxu0 %v1114
      %v1208 = vpop.f32.mrf.mxu0
      %v1209 = vadd.f32 0.0, %v1208
      %v1210 = vpop.f32.mrf.mxu0
      %v1211 = vpop.f32.mrf.mxu0
      %v1212 = vadd.f32 0.0, %v1211
      %v1213 = vpop.f32.mrf.mxu0
      %1214 = vdwg.mxu0
      %s1215 = scalar_lea.vmem %s8, 32
      %v1216 = vld [vmem:[%s1215] sm:$0xf]
      %v1217 = vld [vmem:[%s1215 + $0x4] sm:$0xf]
      %v1218 = vld [vmem:[%s1215 + $0x8] sm:$0xf]
      %v1219 = vld [vmem:[%s1215 + $0xc] sm:$0xf]
      %v1224 = vunpack.c.l.b16 %v1216
      %v1225 = vunpack.c.l.b16 %v1217
      %v1226 = vunpack.c.l.b16 %v1218
      %v1227 = vunpack.c.l.b16 %v1219
      %v1228 = vpack.c.b16 %v1225, %v1224
      %v1229 = vpack.c.b16 %v1227, %v1226
      %1232 = vmatprep.subr.bf16.mxu0 0
      %1233 = vmatpush1.bf16.msra.mxu0 0
      %1234 = vmatprep.subr.bf16.mxu0 0
      %1235 = vmatpush1.bf16.msra.mxu0 0
      %1236 = vmatprep.subr.bf16.mxu0 0
      %1237 = vmatpush1.bf16.msra.mxu0 0
      %1238 = vmatprep.subr.bf16.mxu0 0
      %1239 = vmatpush1.bf16.msra.mxu0 0
      %1240 = vmatprep.subr.bf16.mxu0 0
      %1241 = vmatpush1.bf16.msra.mxu0 0
      %1242 = vmatprep.subr.bf16.mxu0 0
      %1243 = vmatpush1.bf16.msra.mxu0 0
      %1244 = vmatprep.subr.bf16.mxu0 0
      %1245 = vmatpush1.bf16.msra.mxu0 %v1229
      %1246 = vmatprep.subr.bf16.mxu0 0
      %1247 = vmatpush1.bf16.msra.mxu0 %v1228
      %1248 = vmatprep.subr.bf16.mxu0 0
      %1249 = vmatpush2.bf16.msra.mxu0 0
      %1250 = vmatprep.subr.bf16.mxu0 0
      %1251 = vmatpush2.bf16.msra.mxu0 0
      %1252 = vmatprep.subr.bf16.mxu0 0
      %1253 = vmatpush2.bf16.msra.mxu0 0
      %1254 = vmatprep.subr.bf16.mxu0 0
      %1255 = vmatpush2.bf16.msra.mxu0 0
      %1256 = vmatprep.subr.bf16.mxu0 0
      %1257 = vmatpush2.bf16.msra.mxu0 0
      %1258 = vmatprep.subr.bf16.mxu0 0
      %1259 = vmatpush2.bf16.msra.mxu0 0
      %1260 = vmatprep.subr.bf16.mxu0 0
      %1261 = vmatpush2.bf16.msra.mxu0 0
      %1262 = vmatprep.subr.bf16.mxu0 0
      %1263 = vmatpush2.bf16.msra.mxu0 0
      %1264 = vmatprep.mubr.bf16.mxu0 0
      %1265 = vmatmul.mubr.bf16.gmra.mxu0 %v1114
      %v1266 = vpop.f32.mrf.mxu0
      %v1267 = vadd.f32 0.0, %v1266
      %v1268 = vpop.f32.mrf.mxu0
      %v1269 = vpop.f32.mrf.mxu0
      %v1270 = vadd.f32 0.0, %v1269
      %v1271 = vpop.f32.mrf.mxu0
      %1272 = vdwg.mxu0
      %v1273 = vpack.c.bf16 %v1154, %v1151
      %v1274 = vpack.c.bf16 %v1212, %v1209
      %v1276 = vsel %vm610, %v1273, 0
      %v1279 = vsel %vm610, %v1274, 0
      %1281 = vmatprep.subr.bf16.mxu0 0
      %1282 = vmatpush1.bf16.xpose.msra.mxu0 0
      %1283 = vmatprep.subr.bf16.mxu0 0
      %1284 = vmatpush1.bf16.xpose.msra.mxu0 0
      %1285 = vmatprep.subr.bf16.mxu0 0
      %1286 = vmatpush1.bf16.xpose.msra.mxu0 0
      %1287 = vmatprep.subr.bf16.mxu0 0
      %1288 = vmatpush1.bf16.xpose.msra.mxu0 0
      %1289 = vmatprep.subr.bf16.mxu0 0
      %1290 = vmatpush1.bf16.xpose.msra.mxu0 0
      %1291 = vmatprep.subr.bf16.mxu0 0
      %1292 = vmatpush1.bf16.xpose.msra.mxu0 0
      %1293 = vmatprep.subr.bf16.mxu0 0
      %1294 = vmatpush1.bf16.xpose.msra.mxu0 0
      %1295 = vmatprep.subr.bf16.mxu0 0
      %1296 = vmatpush1.bf16.xpose.msra.mxu0 %v1279
      %1297 = vmatprep.subr.bf16.mxu0 0
      %1298 = vmatpush2.bf16.xpose.msra.mxu0 0
      %1299 = vmatprep.subr.bf16.mxu0 0
      %1300 = vmatpush2.bf16.xpose.msra.mxu0 0
      %1301 = vmatprep.subr.bf16.mxu0 0
      %1302 = vmatpush2.bf16.xpose.msra.mxu0 0
      %1303 = vmatprep.subr.bf16.mxu0 0
      %1304 = vmatpush2.bf16.xpose.msra.mxu0 0
      %1305 = vmatprep.subr.bf16.mxu0 0
      %1306 = vmatpush2.bf16.xpose.msra.mxu0 0
      %1307 = vmatprep.subr.bf16.mxu0 0
      %1308 = vmatpush2.bf16.xpose.msra.mxu0 0
      %1309 = vmatprep.subr.bf16.mxu0 0
      %1310 = vmatpush2.bf16.xpose.msra.mxu0 0
      %1311 = vmatprep.subr.bf16.mxu0 0
      %1312 = vmatpush2.bf16.xpose.msra.mxu0 0
      %1313 = vmatprep.mubr.bf16.mxu0 0
      %1314 = vmatmul.mubr.bf16.gmra.mxu0 %v1276
      %v1315 = vpop.f32.mrf.mxu0
      %v1316 = vadd.f32 0.0, %v1315
      %v1317 = vpop.f32.mrf.mxu0
      %v1318 = vpop.f32.mrf.mxu0
      %v1319 = vadd.f32 0.0, %v1318
      %v1320 = vpop.f32.mrf.mxu0
      %1321 = vdwg.mxu0
      %v1322 = vmul.f32 %v1316, 0.35355338
      %v1323 = vmul.f32 %v1319, 0.35355338
      %v1324 = vsel %vm769, %v1322, -inf
      %1325 = vmax.xlane.f32.xlu0 %v1324
      %v1326 = vpop.xlane.xlu0 %1325
      %v1327 = vsel %vm769, %v1323, -inf
      %1328 = vmax.xlane.f32.xlu0 %v1327
      %v1329 = vpop.xlane.xlu0 %1328
      %v1330 = vsub.f32 %v1322, %v1326
      %v1331 = vsub.f32 %v1323, %v1329
      %v1332 = vmul.f32 %v1330, 1.442695
      %v1333 = vpow.pop %v1332
      %v1334 = vmul.f32 %v1331, 1.442695
      %v1335 = vpow.pop %v1334
      %v1336 = vsel %vm769, %v1333, 0.0
      %1337 = vadd.xlane.f32.xlu0 %v1336
      %v1338 = vpop.xlane.xlu0 %1337
      %v1339 = vsel %vm769, %v1335, 0.0
      %1340 = vadd.xlane.f32.xlu0 %v1339
      %v1341 = vpop.xlane.xlu0 %1340
      %v1342 = vrcp.pop %v1338
      %v1343 = vrcp.pop %v1341
      %v1344 = vmul.f32 %v1333, %v1342
      %v1345 = vmul.f32 %v1335, %v1343
      %v1346 = vpack.c.bf16 %v1345, %v1344
      %v1347 = vpack.c.bf16 %v1270, %v1267
      %v1349 = vsel %vm769, %v1346, 0
      %1351 = vmatprep.subr.bf16.mxu0 0
      %1352 = vmatpush1.bf16.msra.mxu0 0
      %1353 = vmatprep.subr.bf16.mxu0 0
      %1354 = vmatpush1.bf16.msra.mxu0 0
      %1355 = vmatprep.subr.bf16.mxu0 0
      %1356 = vmatpush1.bf16.msra.mxu0 0
      %1357 = vmatprep.subr.bf16.mxu0 0
      %1358 = vmatpush1.bf16.msra.mxu0 0
      %1359 = vmatprep.subr.bf16.mxu0 0
      %1360 = vmatpush1.bf16.msra.mxu0 0
      %1361 = vmatprep.subr.bf16.mxu0 0
      %1362 = vmatpush1.bf16.msra.mxu0 0
      %1363 = vmatprep.subr.bf16.mxu0 0
      %1364 = vmatpush1.bf16.msra.mxu0 0
      %1365 = vmatprep.subr.bf16.mxu0 0
      %1366 = vmatpush1.bf16.msra.mxu0 %v1347
      %1367 = vmatprep.subr.bf16.mxu0 0
      %1368 = vmatpush2.bf16.msra.mxu0 0
      %1369 = vmatprep.subr.bf16.mxu0 0
      %1370 = vmatpush2.bf16.msra.mxu0 0
      %1371 = vmatprep.subr.bf16.mxu0 0
      %1372 = vmatpush2.bf16.msra.mxu0 0
      %1373 = vmatprep.subr.bf16.mxu0 0
      %1374 = vmatpush2.bf16.msra.mxu0 0
      %1375 = vmatprep.subr.bf16.mxu0 0
      %1376 = vmatpush2.bf16.msra.mxu0 0
      %1377 = vmatprep.subr.bf16.mxu0 0
      %1378 = vmatpush2.bf16.msra.mxu0 0
      %1379 = vmatprep.subr.bf16.mxu0 0
      %1380 = vmatpush2.bf16.msra.mxu0 0
      %1381 = vmatprep.subr.bf16.mxu0 0
      %1382 = vmatpush2.bf16.msra.mxu0 0
      %1383 = vmatprep.mubr.bf16.mxu0 0
      %1384 = vmatmul.mubr.bf16.gmra.mxu0 %v1349
      %v1385 = vpop.f32.mrf.mxu0
      %v1386 = vadd.f32 0.0, %v1385
      %v1387 = vpop.f32.mrf.mxu0
      %v1388 = vpop.f32.mrf.mxu0
      %v1389 = vadd.f32 0.0, %v1388
      %v1390 = vpop.f32.mrf.mxu0
      %1391 = vdwg.mxu0
      %v1392 = vpack.c.bf16 %v1389, %v1386
      %v1393 = vld [vmem:[%s9] sm:$0xf]
      %v1395 = vsel %vm610, %v1392, 0
      %v1398 = vsel %vm614, %v1393, 0
      %1400 = vmatprep.subr.bf16.mxu0 0
      %1401 = vmatpush1.bf16.msra.mxu0 0
      %1402 = vmatprep.subr.bf16.mxu0 0
      %1403 = vmatpush1.bf16.msra.mxu0 0
      %1404 = vmatprep.subr.bf16.mxu0 0
      %1405 = vmatpush1.bf16.msra.mxu0 0
      %1406 = vmatprep.subr.bf16.mxu0 0
      %1407 = vmatpush1.bf16.msra.mxu0 0
      %1408 = vmatprep.subr.bf16.mxu0 0
      %1409 = vmatpush1.bf16.msra.mxu0 0
      %1410 = vmatprep.subr.bf16.mxu0 0
      %1411 = vmatpush1.bf16.msra.mxu0 0
      %1412 = vmatprep.subr.bf16.mxu0 0
      %1413 = vmatpush1.bf16.msra.mxu0 0
      %1414 = vmatprep.subr.bf16.mxu0 0
      %1415 = vmatpush1.bf16.msra.mxu0 %v1398
      %1416 = vmatprep.subr.bf16.mxu0 0
      %1417 = vmatpush2.bf16.msra.mxu0 0
      %1418 = vmatprep.subr.bf16.mxu0 0
      %1419 = vmatpush2.bf16.msra.mxu0 0
      %1420 = vmatprep.subr.bf16.mxu0 0
      %1421 = vmatpush2.bf16.msra.mxu0 0
      %1422 = vmatprep.subr.bf16.mxu0 0
      %1423 = vmatpush2.bf16.msra.mxu0 0
      %1424 = vmatprep.subr.bf16.mxu0 0
      %1425 = vmatpush2.bf16.msra.mxu0 0
      %1426 = vmatprep.subr.bf16.mxu0 0
      %1427 = vmatpush2.bf16.msra.mxu0 0
      %1428 = vmatprep.subr.bf16.mxu0 0
      %1429 = vmatpush2.bf16.msra.mxu0 0
      %1430 = vmatprep.subr.bf16.mxu0 0
      %1431 = vmatpush2.bf16.msra.mxu0 0
      %1432 = vmatprep.mubr.bf16.mxu0 0
      %1433 = vmatmul.mubr.bf16.gmra.mxu0 %v1395
      %v1434 = vpop.f32.mrf.mxu0
      %v1435 = vadd.f32 0.0, %v1434
      %v1436 = vpop.f32.mrf.mxu0
      %v1437 = vpop.f32.mrf.mxu0
      %v1438 = vadd.f32 0.0, %v1437
      %v1439 = vpop.f32.mrf.mxu0
      %1440 = vdwg.mxu0
      %v1441 = vld [vmem:[%s10] sm:$0x1]
      %v1443 = vlaneseq
      %v1444 = vshrl.u32 %v1443, 7
      %v1445 = vsub.s32 0, %v1444
      %v1446 = vrot.slane %v1441, %v1445
      %v1448 = vmul.f32 %v1435, %v1446
      %v1449 = vmul.f32 %v1438, %v1446
      %v1450 = vsel %vm668, %v1448, 0.0
      %1451 = vadd.xlane.f32.xlu0 %v1450
      %v1452 = vpop.xlane.xlu0 %1451
      %v1453 = vsel %vm668, %v1449, 0.0
      %1454 = vadd.xlane.f32.xlu0 %v1453
      %v1455 = vpop.xlane.xlu0 %1454
      %v1456 = vld [vmem:[%s11] sm:$0x1]
      %v1458 = vsel %vm668, %v1456, 0
      %v1461 = vsel %vm668, %v1435, 0
      %v1464 = vsel %vm668, %v1438, 0
      %1466 = vmatprep.subr.mxu0 0.0
      %1467 = vmatpush1.xpose.msra.mxu0 0.0
      %1468 = vmatprep.subr.mxu0 0.0
      %1469 = vmatpush1.xpose.msra.mxu0 0.0
      %1470 = vmatprep.subr.mxu0 0.0
      %1471 = vmatpush1.xpose.msra.mxu0 0.0
      %1472 = vmatprep.subr.mxu0 0.0
      %1473 = vmatpush1.xpose.msra.mxu0 0.0
      %1474 = vmatprep.subr.mxu0 0.0
      %1475 = vmatpush1.xpose.msra.mxu0 0.0
      %1476 = vmatprep.subr.mxu0 0.0
      %1477 = vmatpush1.xpose.msra.mxu0 0.0
      %1478 = vmatprep.subr.mxu0 0.0
      %1479 = vmatpush1.xpose.msra.mxu0 0.0
      %1480 = vmatprep.subr.mxu0 0.0
      %1481 = vmatpush1.xpose.msra.mxu0 0.0
      %1482 = vmatprep.subr.mxu0 0.0
      %1483 = vmatpush1.xpose.msra.mxu0 0.0
      %1484 = vmatprep.subr.mxu0 0.0
      %1485 = vmatpush1.xpose.msra.mxu0 0.0
      %1486 = vmatprep.subr.mxu0 0.0
      %1487 = vmatpush1.xpose.msra.mxu0 0.0
      %1488 = vmatprep.subr.mxu0 0.0
      %1489 = vmatpush1.xpose.msra.mxu0 0.0
      %1490 = vmatprep.subr.mxu0 0.0
      %1491 = vmatpush1.xpose.msra.mxu0 0.0
      %1492 = vmatprep.subr.mxu0 0.0
      %1493 = vmatpush1.xpose.msra.mxu0 0.0
      %1494 = vmatprep.subr.mxu0 0.0
      %1495 = vmatpush1.xpose.msra.mxu0 %v1464
      %1496 = vmatprep.subr.mxu0 0.0
      %1497 = vmatpush1.xpose.msra.mxu0 %v1461
      %1498 = vmatprep.subr.mxu0 0.0
      %1499 = vmatpush2.xpose.msra.mxu0 0.0
      %1500 = vmatprep.subr.mxu0 0.0
      %1501 = vmatpush2.xpose.msra.mxu0 0.0
      %1502 = vmatprep.subr.mxu0 0.0
      %1503 = vmatpush2.xpose.msra.mxu0 0.0
      %1504 = vmatprep.subr.mxu0 0.0
      %1505 = vmatpush2.xpose.msra.mxu0 0.0
      %1506 = vmatprep.subr.mxu0 0.0
      %1507 = vmatpush2.xpose.msra.mxu0 0.0
      %1508 = vmatprep.subr.mxu0 0.0
      %1509 = vmatpush2.xpose.msra.mxu0 0.0
      %1510 = vmatprep.subr.mxu0 0.0
      %1511 = vmatpush2.xpose.msra.mxu0 0.0
      %1512 = vmatprep.subr.mxu0 0.0
      %1513 = vmatpush2.xpose.msra.mxu0 0.0
      %1514 = vmatprep.subr.mxu0 0.0
      %1515 = vmatpush2.xpose.msra.mxu0 0.0
      %1516 = vmatprep.subr.mxu0 0.0
      %1517 = vmatpush2.xpose.msra.mxu0 0.0
      %1518 = vmatprep.subr.mxu0 0.0
      %1519 = vmatpush2.xpose.msra.mxu0 0.0
      %1520 = vmatprep.subr.mxu0 0.0
      %1521 = vmatpush2.xpose.msra.mxu0 0.0
      %1522 = vmatprep.subr.mxu0 0.0
      %1523 = vmatpush2.xpose.msra.mxu0 0.0
      %1524 = vmatprep.subr.mxu0 0.0
      %1525 = vmatpush2.xpose.msra.mxu0 0.0
      %1526 = vmatprep.subr.mxu0 0.0
      %1527 = vmatpush2.xpose.msra.mxu0 0.0
      %1528 = vmatprep.subr.mxu0 0.0
      %1529 = vmatpush2.xpose.msra.mxu0 0.0
      %1530 = vmatprep.mubr.f32.mxu0 0.0
      %1531 = vmatmul.mubr.f32.gmra.mxu0 %v1458
      %v1532 = vpop.f32.mrf.mxu0
      %v1533 = vadd.f32 0.0, %v1532
      %v1534 = vpop.f32.mrf.mxu0
      %1535 = vdwg.mxu0
      %v1536 = vlaneseq
      %v1537 = vshrl.u32 %v1536, 7
      %v1538 = vsub.s32 0, %v1537
      %v1539 = vrot.slane %v1533, %v1538
      %v1540 = vadd.f32 %v1452, %v1539
      %v1541 = vadd.f32 %v1455, %v1539
      %vm1542 = vcmp.gt.f32.partialorder %v1540, 0.0
      %vm1543 = vcmp.gt.f32.partialorder %v1541, 0.0
      %v1544 = vmul.f32 %v1540, 0.2
      %v1545 = vmul.f32 %v1541, 0.2
      %v1546 = vsel %vm1542, %v1540, %v1544
      %v1547 = vsel %vm1543, %v1541, %v1545
      %v1548 = vadd.f32 %v1546, %v606
      %v1549 = vadd.f32 %v1547, %v607
      %v1550 = vsel %vm769, %v1548, -inf
      %1551 = vmax.xlane.f32.xlu0 %v1550
      %v1552 = vpop.xlane.xlu0 %1551
      %v1553 = vsel %vm769, %v1549, -inf
      %1554 = vmax.xlane.f32.xlu0 %v1553
      %v1555 = vpop.xlane.xlu0 %1554
      %v1556 = vsub.f32 %v1548, %v1552
      %v1557 = vsub.f32 %v1549, %v1555
      %v1558 = vmul.f32 %v1556, 1.442695
      %v1559 = vpow.pop %v1558
      %v1560 = vmul.f32 %v1557, 1.442695
      %v1561 = vpow.pop %v1560
      %v1562 = vsel %vm769, %v1559, 0.0
      %1563 = vadd.xlane.f32.xlu0 %v1562
      %v1564 = vpop.xlane.xlu0 %1563
      %v1565 = vsel %vm769, %v1561, 0.0
      %1566 = vadd.xlane.f32.xlu0 %v1565
      %v1567 = vpop.xlane.xlu0 %1566
      %v1568 = vrcp.pop %v1564
      %v1569 = vrcp.pop %v1567
      %v1570 = vmul.f32 %v1559, %v1568
      %v1571 = vmul.f32 %v1561, %v1569
      %v1572 = vpack.c.bf16 %v1571, %v1570
      %v1573 = vpack.c.bf16 %v1438, %v1435
      %v1575 = vsel %vm769, %v1572, 0
      %1577 = vmatprep.subr.bf16.mxu0 0
      %1578 = vmatpush1.bf16.msra.mxu0 0
      %1579 = vmatprep.subr.bf16.mxu0 0
      %1580 = vmatpush1.bf16.msra.mxu0 0
      %1581 = vmatprep.subr.bf16.mxu0 0
      %1582 = vmatpush1.bf16.msra.mxu0 0
      %1583 = vmatprep.subr.bf16.mxu0 0
      %1584 = vmatpush1.bf16.msra.mxu0 0
      %1585 = vmatprep.subr.bf16.mxu0 0
      %1586 = vmatpush1.bf16.msra.mxu0 0
      %1587 = vmatprep.subr.bf16.mxu0 0
      %1588 = vmatpush1.bf16.msra.mxu0 0
      %1589 = vmatprep.subr.bf16.mxu0 0
      %1590 = vmatpush1.bf16.msra.mxu0 0
      %1591 = vmatprep.subr.bf16.mxu0 0
      %1592 = vmatpush1.bf16.msra.mxu0 %v1573
      %1593 = vmatprep.subr.bf16.mxu0 0
      %1594 = vmatpush2.bf16.msra.mxu0 0
      %1595 = vmatprep.subr.bf16.mxu0 0
      %1596 = vmatpush2.bf16.msra.mxu0 0
      %1597 = vmatprep.subr.bf16.mxu0 0
      %1598 = vmatpush2.bf16.msra.mxu0 0
      %1599 = vmatprep.subr.bf16.mxu0 0
      %1600 = vmatpush2.bf16.msra.mxu0 0
      %1601 = vmatprep.subr.bf16.mxu0 0
      %1602 = vmatpush2.bf16.msra.mxu0 0
      %1603 = vmatprep.subr.bf16.mxu0 0
      %1604 = vmatpush2.bf16.msra.mxu0 0
      %1605 = vmatprep.subr.bf16.mxu0 0
      %1606 = vmatpush2.bf16.msra.mxu0 0
      %1607 = vmatprep.subr.bf16.mxu0 0
      %1608 = vmatpush2.bf16.msra.mxu0 0
      %1609 = vmatprep.mubr.bf16.mxu0 0
      %1610 = vmatmul.mubr.bf16.gmra.mxu0 %v1575
      %v1611 = vpop.f32.mrf.mxu0
      %v1612 = vadd.f32 0.0, %v1611
      %v1613 = vpop.f32.mrf.mxu0
      %v1614 = vpop.f32.mrf.mxu0
      %v1615 = vadd.f32 0.0, %v1614
      %v1616 = vpop.f32.mrf.mxu0
      %1617 = vdwg.mxu0
      %vm1618 = vcmp.gt.f32.partialorder %v1612, 0.0
      %vm1619 = vcmp.gt.f32.partialorder %v1615, 0.0
      %v1620 = vmul.f32 %v1612, 1.442695
      %v1621 = vpow.pop %v1620
      %v1622 = vmul.f32 %v1615, 1.442695
      %v1623 = vpow.pop %v1622
      %v1624 = vsub.f32 %v1621, 1.0
      %v1625 = vsub.f32 %v1623, 1.0
      %v1626 = vsel %vm1618, %v1612, %v1624
      %v1627 = vsel %vm1619, %v1615, %v1625
      %v1628 = vpack.c.bf16 %v1627, %v1626
      %v1629 = vld [vmem:[%s12] sm:$0xf]
      %v1630 = vld [vmem:[%s12 + $0x4] sm:$0xf]
      %v1631 = vld [vmem:[%s12 + $0x8] sm:$0xf]
      %v1632 = vld [vmem:[%s12 + $0xc] sm:$0xf]
      %v1637 = vunpack.c.l.b16 %v1629
      %v1638 = vunpack.c.l.b16 %v1630
      %v1639 = vunpack.c.l.b16 %v1631
      %v1640 = vunpack.c.l.b16 %v1632
      %v1641 = vpack.c.b16 %v1638, %v1637
      %v1642 = vpack.c.b16 %v1640, %v1639
      %v1646 = vsel %vm668, %v1628, 0
      %1648 = vmatprep.subr.bf16.mxu0 0
      %1649 = vmatpush1.bf16.msra.mxu0 0
      %1650 = vmatprep.subr.bf16.mxu0 0
      %1651 = vmatpush1.bf16.msra.mxu0 0
      %1652 = vmatprep.subr.bf16.mxu0 0
      %1653 = vmatpush1.bf16.msra.mxu0 0
      %1654 = vmatprep.subr.bf16.mxu0 0
      %1655 = vmatpush1.bf16.msra.mxu0 0
      %1656 = vmatprep.subr.bf16.mxu0 0
      %1657 = vmatpush1.bf16.msra.mxu0 0
      %1658 = vmatprep.subr.bf16.mxu0 0
      %1659 = vmatpush1.bf16.msra.mxu0 0
      %1660 = vmatprep.subr.bf16.mxu0 0
      %1661 = vmatpush1.bf16.msra.mxu0 %v1642
      %1662 = vmatprep.subr.bf16.mxu0 0
      %1663 = vmatpush1.bf16.msra.mxu0 %v1641
      %1664 = vmatprep.subr.bf16.mxu0 0
      %1665 = vmatpush2.bf16.msra.mxu0 0
      %1666 = vmatprep.subr.bf16.mxu0 0
      %1667 = vmatpush2.bf16.msra.mxu0 0
      %1668 = vmatprep.subr.bf16.mxu0 0
      %1669 = vmatpush2.bf16.msra.mxu0 0
      %1670 = vmatprep.subr.bf16.mxu0 0
      %1671 = vmatpush2.bf16.msra.mxu0 0
      %1672 = vmatprep.subr.bf16.mxu0 0
      %1673 = vmatpush2.bf16.msra.mxu0 0
      %1674 = vmatprep.subr.bf16.mxu0 0
      %1675 = vmatpush2.bf16.msra.mxu0 0
      %1676 = vmatprep.subr.bf16.mxu0 0
      %1677 = vmatpush2.bf16.msra.mxu0 0
      %1678 = vmatprep.subr.bf16.mxu0 0
      %1679 = vmatpush2.bf16.msra.mxu0 0
      %1680 = vmatprep.mubr.bf16.mxu0 0
      %1681 = vmatmul.mubr.bf16.gmra.mxu0 %v1646
      %v1682 = vpop.f32.mrf.mxu0
      %v1683 = vadd.f32 0.0, %v1682
      %v1684 = vpop.f32.mrf.mxu0
      %v1685 = vpop.f32.mrf.mxu0
      %v1686 = vadd.f32 0.0, %v1685
      %v1687 = vpop.f32.mrf.mxu0
      %1688 = vdwg.mxu0
      %v1689 = vld [vmem:[%s13] sm:$0x1]
      %v1691 = vlaneseq
      %v1692 = vshrl.u32 %v1691, 7
      %v1693 = vsub.s32 0, %v1692
      %v1694 = vrot.slane %v1689, %v1693
      %v1696 = vmul.f32 %v1683, %v1694
      %v1697 = vmul.f32 %v1686, %v1694
      %v1698 = vsel %vm668, %v1696, 0.0
      %1699 = vadd.xlane.f32.xlu0 %v1698
      %v1700 = vpop.xlane.xlu0 %1699
      %v1701 = vsel %vm668, %v1697, 0.0
      %1702 = vadd.xlane.f32.xlu0 %v1701
      %v1703 = vpop.xlane.xlu0 %1702
      %v1704 = vld [vmem:[%s14] sm:$0x1]
      %v1706 = vsel %vm668, %v1704, 0
      %v1709 = vsel %vm668, %v1683, 0
      %v1712 = vsel %vm668, %v1686, 0
      %1714 = vmatprep.subr.mxu0 0.0
      %1715 = vmatpush1.xpose.msra.mxu0 0.0
      %1716 = vmatprep.subr.mxu0 0.0
      %1717 = vmatpush1.xpose.msra.mxu0 0.0
      %1718 = vmatprep.subr.mxu0 0.0
      %1719 = vmatpush1.xpose.msra.mxu0 0.0
      %1720 = vmatprep.subr.mxu0 0.0
      %1721 = vmatpush1.xpose.msra.mxu0 0.0
      %1722 = vmatprep.subr.mxu0 0.0
      %1723 = vmatpush1.xpose.msra.mxu0 0.0
      %1724 = vmatprep.subr.mxu0 0.0
      %1725 = vmatpush1.xpose.msra.mxu0 0.0
      %1726 = vmatprep.subr.mxu0 0.0
      %1727 = vmatpush1.xpose.msra.mxu0 0.0
      %1728 = vmatprep.subr.mxu0 0.0
      %1729 = vmatpush1.xpose.msra.mxu0 0.0
      %1730 = vmatprep.subr.mxu0 0.0
      %1731 = vmatpush1.xpose.msra.mxu0 0.0
      %1732 = vmatprep.subr.mxu0 0.0
      %1733 = vmatpush1.xpose.msra.mxu0 0.0
      %1734 = vmatprep.subr.mxu0 0.0
      %1735 = vmatpush1.xpose.msra.mxu0 0.0
      %1736 = vmatprep.subr.mxu0 0.0
      %1737 = vmatpush1.xpose.msra.mxu0 0.0
      %1738 = vmatprep.subr.mxu0 0.0
      %1739 = vmatpush1.xpose.msra.mxu0 0.0
      %1740 = vmatprep.subr.mxu0 0.0
      %1741 = vmatpush1.xpose.msra.mxu0 0.0
      %1742 = vmatprep.subr.mxu0 0.0
      %1743 = vmatpush1.xpose.msra.mxu0 %v1712
      %1744 = vmatprep.subr.mxu0 0.0
      %1745 = vmatpush1.xpose.msra.mxu0 %v1709
      %1746 = vmatprep.subr.mxu0 0.0
      %1747 = vmatpush2.xpose.msra.mxu0 0.0
      %1748 = vmatprep.subr.mxu0 0.0
      %1749 = vmatpush2.xpose.msra.mxu0 0.0
      %1750 = vmatprep.subr.mxu0 0.0
      %1751 = vmatpush2.xpose.msra.mxu0 0.0
      %1752 = vmatprep.subr.mxu0 0.0
      %1753 = vmatpush2.xpose.msra.mxu0 0.0
      %1754 = vmatprep.subr.mxu0 0.0
      %1755 = vmatpush2.xpose.msra.mxu0 0.0
      %1756 = vmatprep.subr.mxu0 0.0
      %1757 = vmatpush2.xpose.msra.mxu0 0.0
      %1758 = vmatprep.subr.mxu0 0.0
      %1759 = vmatpush2.xpose.msra.mxu0 0.0
      %1760 = vmatprep.subr.mxu0 0.0
      %1761 = vmatpush2.xpose.msra.mxu0 0.0
      %1762 = vmatprep.subr.mxu0 0.0
      %1763 = vmatpush2.xpose.msra.mxu0 0.0
      %1764 = vmatprep.subr.mxu0 0.0
      %1765 = vmatpush2.xpose.msra.mxu0 0.0
      %1766 = vmatprep.subr.mxu0 0.0
      %1767 = vmatpush2.xpose.msra.mxu0 0.0
      %1768 = vmatprep.subr.mxu0 0.0
      %1769 = vmatpush2.xpose.msra.mxu0 0.0
      %1770 = vmatprep.subr.mxu0 0.0
      %1771 = vmatpush2.xpose.msra.mxu0 0.0
      %1772 = vmatprep.subr.mxu0 0.0
      %1773 = vmatpush2.xpose.msra.mxu0 0.0
      %1774 = vmatprep.subr.mxu0 0.0
      %1775 = vmatpush2.xpose.msra.mxu0 0.0
      %1776 = vmatprep.subr.mxu0 0.0
      %1777 = vmatpush2.xpose.msra.mxu0 0.0
      %1778 = vmatprep.mubr.f32.mxu0 0.0
      %1779 = vmatmul.mubr.f32.gmra.mxu0 %v1706
      %v1780 = vpop.f32.mrf.mxu0
      %v1781 = vadd.f32 0.0, %v1780
      %v1782 = vpop.f32.mrf.mxu0
      %1783 = vdwg.mxu0
      %v1784 = vlaneseq
      %v1785 = vshrl.u32 %v1784, 7
      %v1786 = vsub.s32 0, %v1785
      %v1787 = vrot.slane %v1781, %v1786
      %v1788 = vadd.f32 %v1700, %v1787
      %v1789 = vadd.f32 %v1703, %v1787
      %vm1790 = vcmp.gt.f32.partialorder %v1788, 0.0
      %vm1791 = vcmp.gt.f32.partialorder %v1789, 0.0
      %v1792 = vmul.f32 %v1788, 0.2
      %v1793 = vmul.f32 %v1789, 0.2
      %v1794 = vsel %vm1790, %v1788, %v1792
      %v1795 = vsel %vm1791, %v1789, %v1793
      %v1796 = vadd.f32 %v1794, %v606
      %v1797 = vadd.f32 %v1795, %v607
      %v1798 = vsel %vm769, %v1796, -inf
      %1799 = vmax.xlane.f32.xlu0 %v1798
      %v1800 = vpop.xlane.xlu0 %1799
      %v1801 = vsel %vm769, %v1797, -inf
      %1802 = vmax.xlane.f32.xlu0 %v1801
      %v1803 = vpop.xlane.xlu0 %1802
      %v1804 = vsub.f32 %v1796, %v1800
      %v1805 = vsub.f32 %v1797, %v1803
      %v1806 = vmul.f32 %v1804, 1.442695
      %v1807 = vpow.pop %v1806
      %v1808 = vmul.f32 %v1805, 1.442695
      %v1809 = vpow.pop %v1808
      %v1810 = vsel %vm769, %v1807, 0.0
      %1811 = vadd.xlane.f32.xlu0 %v1810
      %v1812 = vpop.xlane.xlu0 %1811
      %v1813 = vsel %vm769, %v1809, 0.0
      %1814 = vadd.xlane.f32.xlu0 %v1813
      %v1815 = vpop.xlane.xlu0 %1814
      %v1816 = vrcp.pop %v1812
      %v1817 = vrcp.pop %v1815
      %v1818 = vmul.f32 %v1807, %v1816
      %v1819 = vmul.f32 %v1809, %v1817
      %v1820 = vpack.c.bf16 %v1819, %v1818
      %v1821 = vpack.c.bf16 %v1686, %v1683
      %v1823 = vsel %vm769, %v1820, 0
      %1825 = vmatprep.subr.bf16.mxu0 0
      %1826 = vmatpush1.bf16.msra.mxu0 0
      %1827 = vmatprep.subr.bf16.mxu0 0
      %1828 = vmatpush1.bf16.msra.mxu0 0
      %1829 = vmatprep.subr.bf16.mxu0 0
      %1830 = vmatpush1.bf16.msra.mxu0 0
      %1831 = vmatprep.subr.bf16.mxu0 0
      %1832 = vmatpush1.bf16.msra.mxu0 0
      %1833 = vmatprep.subr.bf16.mxu0 0
      %1834 = vmatpush1.bf16.msra.mxu0 0
      %1835 = vmatprep.subr.bf16.mxu0 0
      %1836 = vmatpush1.bf16.msra.mxu0 0
      %1837 = vmatprep.subr.bf16.mxu0 0
      %1838 = vmatpush1.bf16.msra.mxu0 0
      %1839 = vmatprep.subr.bf16.mxu0 0
      %1840 = vmatpush1.bf16.msra.mxu0 %v1821
      %1841 = vmatprep.subr.bf16.mxu0 0
      %1842 = vmatpush2.bf16.msra.mxu0 0
      %1843 = vmatprep.subr.bf16.mxu0 0
      %1844 = vmatpush2.bf16.msra.mxu0 0
      %1845 = vmatprep.subr.bf16.mxu0 0
      %1846 = vmatpush2.bf16.msra.mxu0 0
      %1847 = vmatprep.subr.bf16.mxu0 0
      %1848 = vmatpush2.bf16.msra.mxu0 0
      %1849 = vmatprep.subr.bf16.mxu0 0
      %1850 = vmatpush2.bf16.msra.mxu0 0
      %1851 = vmatprep.subr.bf16.mxu0 0
      %1852 = vmatpush2.bf16.msra.mxu0 0
      %1853 = vmatprep.subr.bf16.mxu0 0
      %1854 = vmatpush2.bf16.msra.mxu0 0
      %1855 = vmatprep.subr.bf16.mxu0 0
      %1856 = vmatpush2.bf16.msra.mxu0 0
      %1857 = vmatprep.mubr.bf16.mxu0 0
      %1858 = vmatmul.mubr.bf16.gmra.mxu0 %v1823
      %v1859 = vpop.f32.mrf.mxu0
      %v1860 = vadd.f32 0.0, %v1859
      %v1861 = vpop.f32.mrf.mxu0
      %v1862 = vpop.f32.mrf.mxu0
      %v1863 = vadd.f32 0.0, %v1862
      %v1864 = vpop.f32.mrf.mxu0
      %1865 = vdwg.mxu0
      %vm1866 = vcmp.gt.f32.partialorder %v1860, 0.0
      %vm1867 = vcmp.gt.f32.partialorder %v1863, 0.0
      %v1868 = vmul.f32 %v1860, 1.442695
      %v1869 = vpow.pop %v1868
      %v1870 = vmul.f32 %v1863, 1.442695
      %v1871 = vpow.pop %v1870
      %v1872 = vsub.f32 %v1869, 1.0
      %v1873 = vsub.f32 %v1871, 1.0
      %v1874 = vsel %vm1866, %v1860, %v1872
      %v1875 = vsel %vm1867, %v1863, %v1873
      %1876 = vst.msk [vmem:[#allocation2] sm:$0xff] %vm668, 0.0
      %1877 = vst.msk [vmem:[#allocation2 + $0x8] sm:$0xff] %vm668, 0.0
      %1878 = vst.msk [vmem:[#allocation2 + $0x10] sm:$0xff] %vm668, 0.0
      %1879 = vst.msk [vmem:[#allocation2 + $0x18] sm:$0xff] %vm668, 0.0
      %1880 = vst.msk [vmem:[#allocation2 + $0x8] sm:$0xff] %vm668, %v1874
      %1881 = vst.msk [vmem:[#allocation2 + $0x10] sm:$0xff] %vm668, %v1875
      %v1882 = vld [vmem:[#allocation2 + $0x7] sm:$0xff]
      %v1883 = vld [vmem:[#allocation2 + $0xf] sm:$0xff]
      %v1884 = vld [vmem:[#allocation2 + $0x9] sm:$0xff]
      %v1885 = vld [vmem:[#allocation2 + $0x11] sm:$0xff]
      %v1886 = vpack.c.bf16 %v1883, %v1882
      %v1887 = vld [vmem:[%s15] sm:$0xf]
      %v1888 = vld [vmem:[%s15 + $0x4] sm:$0xf]
      %v1889 = vld [vmem:[%s15 + $0x8] sm:$0xf]
      %v1890 = vld [vmem:[%s15 + $0xc] sm:$0xf]
      %v1891 = vpack.c.bf16 %v1875, %v1874
      %v1892 = vld [vmem:[%s16] sm:$0xf]
      %v1893 = vld [vmem:[%s16 + $0x4] sm:$0xf]
      %v1894 = vld [vmem:[%s16 + $0x8] sm:$0xf]
      %v1895 = vld [vmem:[%s16 + $0xc] sm:$0xf]
      %v1900 = vunpack.c.l.b16 %v1892
      %v1901 = vunpack.c.l.b16 %v1893
      %v1902 = vunpack.c.l.b16 %v1894
      %v1903 = vunpack.c.l.b16 %v1895
      %v1904 = vpack.c.b16 %v1901, %v1900
      %v1905 = vpack.c.b16 %v1903, %v1902
      %v1909 = vsel %vm668, %v1891, 0
      %1911 = vmatprep.subr.bf16.mxu0 0
      %1912 = vmatpush1.bf16.msra.mxu0 0
      %1913 = vmatprep.subr.bf16.mxu0 0
      %1914 = vmatpush1.bf16.msra.mxu0 0
      %1915 = vmatprep.subr.bf16.mxu0 0
      %1916 = vmatpush1.bf16.msra.mxu0 0
      %1917 = vmatprep.subr.bf16.mxu0 0
      %1918 = vmatpush1.bf16.msra.mxu0 0
      %1919 = vmatprep.subr.bf16.mxu0 0
      %1920 = vmatpush1.bf16.msra.mxu0 0
      %1921 = vmatprep.subr.bf16.mxu0 0
      %1922 = vmatpush1.bf16.msra.mxu0 0
      %1923 = vmatprep.subr.bf16.mxu0 0
      %1924 = vmatpush1.bf16.msra.mxu0 %v1905
      %1925 = vmatprep.subr.bf16.mxu0 0
      %1926 = vmatpush1.bf16.msra.mxu0 %v1904
      %1927 = vmatprep.subr.bf16.mxu0 0
      %1928 = vmatpush2.bf16.msra.mxu0 0
      %1929 = vmatprep.subr.bf16.mxu0 0
      %1930 = vmatpush2.bf16.msra.mxu0 0
      %1931 = vmatprep.subr.bf16.mxu0 0
      %1932 = vmatpush2.bf16.msra.mxu0 0
      %1933 = vmatprep.subr.bf16.mxu0 0
      %1934 = vmatpush2.bf16.msra.mxu0 0
      %1935 = vmatprep.subr.bf16.mxu0 0
      %1936 = vmatpush2.bf16.msra.mxu0 0
      %1937 = vmatprep.subr.bf16.mxu0 0
      %1938 = vmatpush2.bf16.msra.mxu0 0
      %1939 = vmatprep.subr.bf16.mxu0 0
      %1940 = vmatpush2.bf16.msra.mxu0 0
      %1941 = vmatprep.subr.bf16.mxu0 0
      %1942 = vmatpush2.bf16.msra.mxu0 0
      %1943 = vmatprep.mubr.bf16.mxu0 0
      %1944 = vmatmul.mubr.bf16.gmra.mxu0 %v1909
      %v1945 = vpop.f32.mrf.mxu0
      %v1946 = vadd.f32 0.0, %v1945
      %v1947 = vpop.f32.mrf.mxu0
      %v1948 = vpop.f32.mrf.mxu0
      %v1949 = vadd.f32 0.0, %v1948
      %v1950 = vpop.f32.mrf.mxu0
      %1951 = vdwg.mxu0
      %v1956 = vunpack.c.l.b16 %v1887
      %v1957 = vunpack.c.l.b16 %v1888
      %v1958 = vunpack.c.l.b16 %v1889
      %v1959 = vunpack.c.l.b16 %v1890
      %v1960 = vpack.c.b16 %v1957, %v1956
      %v1961 = vpack.c.b16 %v1959, %v1958
      %v1965 = vsel %vm668, %v1886, 0
      %1967 = vmatprep.subr.bf16.mxu0 0
      %1968 = vmatpush1.bf16.msra.mxu0 0
      %1969 = vmatprep.subr.bf16.mxu0 0
      %1970 = vmatpush1.bf16.msra.mxu0 0
      %1971 = vmatprep.subr.bf16.mxu0 0
      %1972 = vmatpush1.bf16.msra.mxu0 0
      %1973 = vmatprep.subr.bf16.mxu0 0
      %1974 = vmatpush1.bf16.msra.mxu0 0
      %1975 = vmatprep.subr.bf16.mxu0 0
      %1976 = vmatpush1.bf16.msra.mxu0 0
      %1977 = vmatprep.subr.bf16.mxu0 0
      %1978 = vmatpush1.bf16.msra.mxu0 0
      %1979 = vmatprep.subr.bf16.mxu0 0
      %1980 = vmatpush1.bf16.msra.mxu0 %v1961
      %1981 = vmatprep.subr.bf16.mxu0 0
      %1982 = vmatpush1.bf16.msra.mxu0 %v1960
      %1983 = vmatprep.subr.bf16.mxu0 0
      %1984 = vmatpush2.bf16.msra.mxu0 0
      %1985 = vmatprep.subr.bf16.mxu0 0
      %1986 = vmatpush2.bf16.msra.mxu0 0
      %1987 = vmatprep.subr.bf16.mxu0 0
      %1988 = vmatpush2.bf16.msra.mxu0 0
      %1989 = vmatprep.subr.bf16.mxu0 0
      %1990 = vmatpush2.bf16.msra.mxu0 0
      %1991 = vmatprep.subr.bf16.mxu0 0
      %1992 = vmatpush2.bf16.msra.mxu0 0
      %1993 = vmatprep.subr.bf16.mxu0 0
      %1994 = vmatpush2.bf16.msra.mxu0 0
      %1995 = vmatprep.subr.bf16.mxu0 0
      %1996 = vmatpush2.bf16.msra.mxu0 0
      %1997 = vmatprep.subr.bf16.mxu0 0
      %1998 = vmatpush2.bf16.msra.mxu0 0
      %1999 = vmatprep.mubr.bf16.mxu0 0
      %2000 = vmatmul.mubr.bf16.gmra.mxu0 %v1965
      %v2001 = vpop.f32.mrf.mxu0
      %v2002 = vadd.f32 %v1946, %v2001
      %v2003 = vpop.f32.mrf.mxu0
      %v2004 = vpop.f32.mrf.mxu0
      %v2005 = vadd.f32 %v1949, %v2004
      %v2006 = vpop.f32.mrf.mxu0
      %2007 = vdwg.mxu0
      %v2008 = vpack.c.bf16 %v1885, %v1884
      %v2009 = vld [vmem:[%s17] sm:$0xf]
      %v2010 = vld [vmem:[%s17 + $0x4] sm:$0xf]
      %v2011 = vld [vmem:[%s17 + $0x8] sm:$0xf]
      %v2012 = vld [vmem:[%s17 + $0xc] sm:$0xf]
      %v2017 = vunpack.c.l.b16 %v2009
      %v2018 = vunpack.c.l.b16 %v2010
      %v2019 = vunpack.c.l.b16 %v2011
      %v2020 = vunpack.c.l.b16 %v2012
      %v2021 = vpack.c.b16 %v2018, %v2017
      %v2022 = vpack.c.b16 %v2020, %v2019
      %v2026 = vsel %vm668, %v2008, 0
      %2028 = vmatprep.subr.bf16.mxu0 0
      %2029 = vmatpush1.bf16.msra.mxu0 0
      %2030 = vmatprep.subr.bf16.mxu0 0
      %2031 = vmatpush1.bf16.msra.mxu0 0
      %2032 = vmatprep.subr.bf16.mxu0 0
      %2033 = vmatpush1.bf16.msra.mxu0 0
      %2034 = vmatprep.subr.bf16.mxu0 0
      %2035 = vmatpush1.bf16.msra.mxu0 0
      %2036 = vmatprep.subr.bf16.mxu0 0
      %2037 = vmatpush1.bf16.msra.mxu0 0
      %2038 = vmatprep.subr.bf16.mxu0 0
      %2039 = vmatpush1.bf16.msra.mxu0 0
      %2040 = vmatprep.subr.bf16.mxu0 0
      %2041 = vmatpush1.bf16.msra.mxu0 %v2022
      %2042 = vmatprep.subr.bf16.mxu0 0
      %2043 = vmatpush1.bf16.msra.mxu0 %v2021
      %2044 = vmatprep.subr.bf16.mxu0 0
      %2045 = vmatpush2.bf16.msra.mxu0 0
      %2046 = vmatprep.subr.bf16.mxu0 0
      %2047 = vmatpush2.bf16.msra.mxu0 0
      %2048 = vmatprep.subr.bf16.mxu0 0
      %2049 = vmatpush2.bf16.msra.mxu0 0
      %2050 = vmatprep.subr.bf16.mxu0 0
      %2051 = vmatpush2.bf16.msra.mxu0 0
      %2052 = vmatprep.subr.bf16.mxu0 0
      %2053 = vmatpush2.bf16.msra.mxu0 0
      %2054 = vmatprep.subr.bf16.mxu0 0
      %2055 = vmatpush2.bf16.msra.mxu0 0
      %2056 = vmatprep.subr.bf16.mxu0 0
      %2057 = vmatpush2.bf16.msra.mxu0 0
      %2058 = vmatprep.subr.bf16.mxu0 0
      %2059 = vmatpush2.bf16.msra.mxu0 0
      %2060 = vmatprep.mubr.bf16.mxu0 0
      %2061 = vmatmul.mubr.bf16.gmra.mxu0 %v2026
      %v2062 = vpop.f32.mrf.mxu0
      %v2063 = vadd.f32 0.0, %v2062
      %v2064 = vpop.f32.mrf.mxu0
      %v2065 = vpop.f32.mrf.mxu0
      %v2066 = vadd.f32 0.0, %v2065
      %v2067 = vpop.f32.mrf.mxu0
      %2068 = vdwg.mxu0
      %v2069 = vadd.f32 %v2002, %v2063
      %v2070 = vadd.f32 %v2005, %v2066
      %v2071 = vld [vmem:[%s18] sm:$0x1]
      %v2073 = vlaneseq
      %v2074 = vshrl.u32 %v2073, 7
      %v2075 = vsub.s32 0, %v2074
      %v2076 = vrot.slane %v2071, %v2075
      %v2078 = vadd.f32 %v2069, %v2076
      %v2079 = vadd.f32 %v2070, %v2076
      %vm2080 = vcmask 31744
      %2081 = vst.msk [vmem:[%s602] sm:$0xff] %vm2080, %v2078
      %2082 = vst.msk [vmem:[%s602 + $0x8] sm:$0xff] %vm2080, %v2079
      %p2083 = scmp.lt.s32.totalorder %s30, 1
      %s2084 = scalar_select %p2083, %s30, 1
      %s2085 = smul.addr %s2084, 2
      %s2086 = smul.addr %s2085, 8
      %s2087 = scalar_lea.vmem %s19, %s2086
      // Predicated region
      $region97: #{stf_informer_forward.1} parent=95 // pred_check
        %p2088 = pneg %p452
      $region98: #{stf_informer_forward.1} parent=95 // pred_check_branch
        %2090 = sbr.rel (%p2088) target = $region100
      $region99: #{stf_informer_forward.1} parent=95 // pred_region
        _
      $region100: #{stf_informer_forward.1} parent=95 // pred_fallthru
        _
    $region96: #{stf_informer_forward.1} parent=5 // pred_fallthru
      _
    %p2091 = scmp.le.s32.totalorder 2, %s25
    // Predicated region
    $region101: #{stf_informer_forward.1} parent=5 // pred_check
      %p2092 = pneg %p2091
    $region102: #{stf_informer_forward.1} parent=5 // pred_check_branch
      %2094 = sbr.rel (%p2092) target = $region104
    $region103: #{stf_informer_forward.1} parent=5 // pred_region
      %s2095 = ssub.s32 %s25, 2
      // Predicated region
      $region105: #{stf_informer_forward.1} parent=103 // pred_check
        %p2096 = pneg %p458
      $region106: #{stf_informer_forward.1} parent=103 // pred_check_branch
        %2098 = sbr.rel (%p2096) target = $region108
      $region107: #{stf_informer_forward.1} parent=103 // pred_region
        %p2099 = scmp.lt.s32.totalorder %s31, 1
        %s2100 = scalar_select %p2099, %s31, 1
        %s2101 = smul.addr %s2100, 2
        %s2102 = smul.addr %s2101, 8
        %s2103 = scalar_lea.vmem %s19, %s2102
      $region108: #{stf_informer_forward.1} parent=103 // pred_fallthru
        _
    $region104: #{stf_informer_forward.1} parent=5 // pred_fallthru
      _
  $region6: #{stf_informer_forward.1} parent=0 // loop_footer
    %s29 = sadd.s32 1, %s25
  $region7: #{stf_informer_forward.1} parent=0 // loop_footer_branch
    %24 = sbr.rel target = $region3
  $region8: #{stf_informer_forward.1} parent=0 // loop_exit
    _

</llo_original>
